<compile_context>
chip_gen: v6e
topology: v6e:2x2x1
jax: 0.10.0
libtpu: 0.0.40
codegen_flags: <defaults>
</compile_context>

<pallas_src>
import math

import jax
import jax.numpy as jnp
import numpy as np
from jax.experimental import pallas as pl
from jax.experimental.pallas import tpu as pltpu

DIM = 32
HEADS = 4
HEAD_DIM = DIM // HEADS
LAYERS = 2
BATCH = 2
SEQ_AUDIO = 8
SEQ_VIDEO = 12          # different from audio -> exercises the resample path
EPS = 1e-5
W_IN_LANES = ((3 * DIM + 127) // 128) * 128   # fused QKV weight, lane-aligned

# rows of the packed per-layer vector table `vec` : (LAYERS, 12, DIM)
(ROW_BQ_A, ROW_BK_A, ROW_BV_A,
 ROW_BQ_V, ROW_BK_V, ROW_BV_V,
 ROW_BO_A2V, ROW_BO_V2A,
 ROW_LN0_W, ROW_LN0_B, ROW_LN1_W, ROW_LN1_B) = range(12)


def _layernorm(x, w, b):
    mu = jnp.mean(x, axis=-1, keepdims=True)
    var = jnp.mean((x - mu) ** 2, axis=-1, keepdims=True)
    return (x - mu) * jax.lax.rsqrt(var + EPS) * w + b


def bidir_xattn_kernel(x_ref, mask_ref, w_in_ref, w_o_ref, vec_ref, out_ref):
    BT, D = out_ref.shape              # (B*T, DIM)
    HD = D // HEADS

    x = x_ref[...]                     # (2*BT, D) f32 : [audio ; video]
    a = x[:BT]
    v = x[BT:]
    mask = mask_ref[...]               # (2*BT, 2*BT) f32 additive block-diag bias

    # TODO(synk): grid-less single-step design + static layer loop is right for
    # these toy sizes; add a batch/q-tile grid ("parallel") and a fori_loop /
    # grid axis over layers before scaling B/T/H/LAYERS (v7x: 64 MiB VMEM, 2 TC).
    for i in range(LAYERS):
        vec_i = vec_ref[i]             # (12, D) f32

        # ---- fused Q|K|V projection: one bf16 matmul per stream
        #      (1/sqrt(head_dim) already folded into the query weight/bias) ----
        qkv_a = jnp.dot(a.astype(jnp.bfloat16), w_in_ref[i, 0],
                        preferred_element_type=jnp.float32)
        qkv_v = jnp.dot(v.astype(jnp.bfloat16), w_in_ref[i, 1],
                        preferred_element_type=jnp.float32)

        q_a = qkv_a[:, 0 * D:1 * D] + vec_i[ROW_BQ_A:ROW_BQ_A + 1]
        k_a = qkv_a[:, 1 * D:2 * D] + vec_i[ROW_BK_A:ROW_BK_A + 1]
        v_a = qkv_a[:, 2 * D:3 * D] + vec_i[ROW_BV_A:ROW_BV_A + 1]
        q_v = qkv_v[:, 0 * D:1 * D] + vec_i[ROW_BQ_V:ROW_BQ_V + 1]
        k_v = qkv_v[:, 1 * D:2 * D] + vec_i[ROW_BK_V:ROW_BK_V + 1]
        v_v = qkv_v[:, 2 * D:3 * D] + vec_i[ROW_BV_V:ROW_BV_V + 1]

        # ---- stack ONLY (stream, batch) along sublanes; heads stay on lanes.
        #      a2v queries (audio) read video K/V; v2a queries (video) read
        #      audio K/V; the block-diagonal mask keeps (stream, batch) groups
        #      separate. ----
        q16 = jnp.concatenate([q_a, q_v], axis=0).astype(jnp.bfloat16)     # (2BT, D)
        k16 = jnp.concatenate([k_v, k_a], axis=0).astype(jnp.bfloat16)
        val16 = jnp.concatenate([v_v, v_a], axis=0).astype(jnp.bfloat16)

        ctx_heads = []
        for h in range(HEADS):
            sl = slice(h * HD, (h + 1) * HD)
            s = jax.lax.dot_general(q16[:, sl], k16[:, sl],
                                    (((1,), (1,)), ((), ())),
                                    preferred_element_type=jnp.float32)     # (2BT, 2BT)
            s = s + mask
            s = s - jnp.max(s, axis=-1, keepdims=True)
            p = jnp.exp(s)
            p = p * pl.reciprocal(jnp.sum(p, axis=-1, keepdims=True), approx=True)
            ctx_heads.append(jnp.dot(p.astype(jnp.bfloat16), val16[:, sl],
                                     preferred_element_type=jnp.float32))   # (2BT, HD)
        ctx = jnp.concatenate(ctx_heads, axis=1)                            # (2BT, D)

        # ---- output projections + LayerNorm + residual adds ----
        a2v = jnp.dot(ctx[:BT].astype(jnp.bfloat16), w_o_ref[i, 0],
                      preferred_element_type=jnp.float32) \
            + vec_i[ROW_BO_A2V:ROW_BO_A2V + 1]
        v2a = jnp.dot(ctx[BT:].astype(jnp.bfloat16), w_o_ref[i, 1],
                      preferred_element_type=jnp.float32) \
            + vec_i[ROW_BO_V2A:ROW_BO_V2A + 1]

        a = a + _layernorm(v2a, vec_i[ROW_LN0_W:ROW_LN0_W + 1],
                           vec_i[ROW_LN0_B:ROW_LN0_B + 1])
        v = v + _layernorm(a2v, vec_i[ROW_LN1_W:ROW_LN1_W + 1],
                           vec_i[ROW_LN1_B:ROW_LN1_B + 1])

    out_ref[...] = (0.5 * (a + v)).astype(out_ref.dtype)


# ----------------------------------------------------------------------------
# Wrapper, parameter packing, plain-JAX reference
# ----------------------------------------------------------------------------
def linear_interpolate(x, out_len):
    """Matches F.interpolate(x.transpose(1,2), size=out_len, mode='linear',
    align_corners=False).transpose(1,2) for x of shape (B, T_in, D)."""
    B, T_in, D = x.shape
    if T_in == out_len:
        return x
    scale = T_in / out_len
    pos = (jnp.arange(out_len, dtype=jnp.float32) + 0.5) * scale - 0.5
    pos = jnp.clip(pos, 0.0, T_in - 1)
    lo = jnp.floor(pos).astype(jnp.int32)
    hi = jnp.minimum(lo + 1, T_in - 1)
    w = (pos - lo.astype(jnp.float32))[None, :, None]
    return x[:, lo, :] * (1.0 - w) + x[:, hi, :] * w


def pack_params(params):
    """Pack per-layer weights into 3 arrays (few DMA descriptors), fold the
    1/sqrt(head_dim) score scale into wq/bq, store matmul weights in bf16,
    and pad the fused QKV weight to a 128-lane slab."""
    scale = 1.0 / math.sqrt(HEAD_DIM)
    pad = ((0, 0), (0, W_IN_LANES - 3 * DIM))
    w_in, w_o, vec = [], [], []
    for lp in params["layers"]:
        a2v, v2a = lp["a2v"], lp["v2a"]
        w_in.append(jnp.stack([
            # applied to audio: a2v queries, v2a keys/values
            jnp.pad(jnp.concatenate([a2v["wq"] * scale, v2a["wk"], v2a["wv"]], axis=1), pad),
            # applied to video: v2a queries, a2v keys/values
            jnp.pad(jnp.concatenate([v2a["wq"] * scale, a2v["wk"], a2v["wv"]], axis=1), pad),
        ]))
        w_o.append(jnp.stack([a2v["wo"], v2a["wo"]]))
        vec.append(jnp.stack([
            a2v["bq"] * scale, v2a["bk"], v2a["bv"],   # biases for q_a, k_a, v_a
            v2a["bq"] * scale, a2v["bk"], a2v["bv"],   # biases for q_v, k_v, v_v
            a2v["bo"], v2a["bo"],
            lp["ln0_w"], lp["ln0_b"], lp["ln1_w"], lp["ln1_b"],
        ]))
    return (jnp.stack(w_in).astype(jnp.bfloat16),
            jnp.stack(w_o).astype(jnp.bfloat16),
            jnp.stack(vec).astype(jnp.float32))


@jax.jit
def bidirectional_cross_attention(audio, video, w_in, w_o, vec):
    B, T, D = audio.shape
    if video.shape[1] != T:
        # TODO(synk): linear length-matching kept as plain-JAX gather glue; it
        # only runs when the two streams have different sequence lengths.
        video = linear_interpolate(video, T)
    BT = B * T
    # Flattened, stacked input: one (2*B*T, D) slab -> no in-kernel reshape
    # across the (8,128) tile and a single input DMA for both streams.
    x = jnp.concatenate([audio.reshape(BT, D), video.reshape(BT, D)], axis=0)
    # Layer-invariant additive block-diagonal mask over (stream, batch) groups.
    g = jnp.arange(2 * BT, dtype=jnp.int32) // T
    mask = jnp.where(g[:, None] == g[None, :], 0.0, -1e30).astype(jnp.float32)
    out = pl.pallas_call(
        bidir_xattn_kernel,
        out_shape=jax.ShapeDtypeStruct((BT, D), jnp.float32),
        in_specs=[pl.BlockSpec(memory_space=pltpu.MemorySpace.VMEM)] * 5,
        out_specs=pl.BlockSpec(memory_space=pltpu.MemorySpace.VMEM),
    )(x, mask, w_in, w_o, vec)
    return out.reshape(B, T, D)


def _mha_ref(q_in, kv_in, p):
    B, Tq, D = q_in.shape
    Tk = kv_in.shape[1]
    q = q_in @ p["wq"] + p["bq"]
    k = kv_in @ p["wk"] + p["bk"]
    v = kv_in @ p["wv"] + p["bv"]
    qh = q.reshape(B, Tq, HEADS, HEAD_DIM).transpose(0, 2, 1, 3)
    kh = k.reshape(B, Tk, HEADS, HEAD_DIM).transpose(0, 2, 1, 3)
    vh = v.reshape(B, Tk, HEADS, HEAD_DIM).transpose(0, 2, 1, 3)
    s = jnp.einsum("bhqd,bhkd->bhqk", qh, kh) / math.sqrt(HEAD_DIM)
    a = jax.nn.softmax(s, axis=-1)
    o = jnp.einsum("bhqk,bhkd->bhqd", a, vh).transpose(0, 2, 1, 3).reshape(B, Tq, D)
    return o @ p["wo"] + p["bo"]


def reference(audio, video, params):
    T = audio.shape[1]
    if video.shape[1] != T:
        video = linear_interpolate(video, T)
    for lp in params["layers"]:
        a2v = _mha_ref(audio, video, lp["a2v"])
        v2a = _mha_ref(video, audio, lp["v2a"])
        audio = audio + _layernorm(v2a, lp["ln0_w"], lp["ln0_b"])
        video = video + _layernorm(a2v, lp["ln1_w"], lp["ln1_b"])
    return 0.5 * (audio + video)


def init_params(key):
    layers = []
    for lkey in jax.random.split(key, LAYERS):
        ks = iter(jax.random.split(lkey, 32))

        def rnd(shape, scale=0.2):
            return scale * jax.random.normal(next(ks), shape, jnp.float32)

        def attn():
            return dict(wq=rnd((DIM, DIM)), bq=rnd((DIM,)),
                        wk=rnd((DIM, DIM)), bk=rnd((DIM,)),
                        wv=rnd((DIM, DIM)), bv=rnd((DIM,)),
                        wo=rnd((DIM, DIM)), bo=rnd((DIM,)))

        layers.append(dict(a2v=attn(), v2a=attn(),
                           ln0_w=1.0 + rnd((DIM,)), ln0_b=rnd((DIM,)),
                           ln1_w=1.0 + rnd((DIM,)), ln1_b=rnd((DIM,))))
    return {"layers": layers}


if __name__ == "__main__":
    key = jax.random.PRNGKey(0)
    ka, kv, kp = jax.random.split(key, 3)
    audio = jax.random.normal(ka, (BATCH, SEQ_AUDIO, DIM), jnp.float32)
    video = jax.random.normal(kv, (BATCH, SEQ_VIDEO, DIM), jnp.float32)
    params = init_params(kp)
    w_in, w_o, vec = pack_params(params)

    out = bidirectional_cross_attention(audio, video, w_in, w_o, vec)
    out = jax.block_until_ready(out)

    ref = reference(audio, video, params)
    # Tolerance accounts for bf16 MXU operands (f32 accumulation) and the
    # approx-reciprocal softmax normalization; the f32 reference is exact.
    np.testing.assert_allclose(np.asarray(out), np.asarray(ref), rtol=2e-2, atol=3e-2)
    print("KERNEL_OK")
</pallas_src>

<mosaic_0001>
module attributes {stable_mosaic.version = 11 : i64} {
  func.func @bidir_xattn_kernel(%arg0: memref<32x32xf32, #tpu.memory_space<vmem>>, %arg1: memref<32x32xf32, #tpu.memory_space<vmem>>, %arg2: memref<2x2x32x128xbf16, #tpu.memory_space<vmem>>, %arg3: memref<2x2x32x32xbf16, #tpu.memory_space<vmem>>, %arg4: memref<2x12x32xf32, #tpu.memory_space<vmem>>, %arg5: memref<16x32xf32, #tpu.memory_space<vmem>>) attributes {dimension_semantics = [], scalar_prefetch = 0 : i64, scratch_operands = 0 : i64, tpu.core_type = #tpu.core_type<tc>} {
    %c0 = arith.constant 0 : index
    %c0_0 = arith.constant 0 : index
    %0 = vector.load %arg0[%c0, %c0_0] : memref<32x32xf32, #tpu.memory_space<vmem>>, vector<32x32xf32>
    %1 = vector.extract_strided_slice %0 {offsets = [0, 0], sizes = [16, 32], strides = [1, 1]} : vector<32x32xf32> to vector<16x32xf32>
    %2 = vector.extract_strided_slice %0 {offsets = [16, 0], sizes = [16, 32], strides = [1, 1]} : vector<32x32xf32> to vector<16x32xf32>
    %c0_1 = arith.constant 0 : index
    %c0_2 = arith.constant 0 : index
    %3 = vector.load %arg1[%c0_1, %c0_2] : memref<32x32xf32, #tpu.memory_space<vmem>>, vector<32x32xf32>
    %c0_3 = arith.constant 0 : index
    %c0_4 = arith.constant 0 : index
    %c0_5 = arith.constant 0 : index
    %4 = vector.load %arg4[%c0_3, %c0_4, %c0_5] : memref<2x12x32xf32, #tpu.memory_space<vmem>>, vector<1x12x32xf32>
    %5 = vector.shape_cast %4 : vector<1x12x32xf32> to vector<12x32xf32>
    %6 = arith.truncf %1 : vector<16x32xf32> to vector<16x32xbf16>
    %c0_6 = arith.constant 0 : index
    %c0_7 = arith.constant 0 : index
    %c0_8 = arith.constant 0 : index
    %c0_9 = arith.constant 0 : index
    %7 = vector.load %arg2[%c0_6, %c0_7, %c0_8, %c0_9] : memref<2x2x32x128xbf16, #tpu.memory_space<vmem>>, vector<1x1x32x128xbf16>
    %8 = vector.shape_cast %7 : vector<1x1x32x128xbf16> to vector<32x128xbf16>
    %cst = arith.constant dense<0.000000e+00> : vector<16x128xf32>
    %9 = tpu.matmul %6, %8, %cst {dimension_numbers = #tpu.dot_dimension_numbers<[1], [0], [0], [1], [0, 0, 1, 1], [], []>} : vector<16x32xbf16>, vector<32x128xbf16>, vector<16x128xf32> -> vector<16x128xf32>
    %10 = arith.truncf %2 : vector<16x32xf32> to vector<16x32xbf16>
    %c0_10 = arith.constant 0 : index
    %c1 = arith.constant 1 : index
    %c0_11 = arith.constant 0 : index
    %c0_12 = arith.constant 0 : index
    %11 = vector.load %arg2[%c0_10, %c1, %c0_11, %c0_12] : memref<2x2x32x128xbf16, #tpu.memory_space<vmem>>, vector<1x1x32x128xbf16>
    %12 = vector.shape_cast %11 : vector<1x1x32x128xbf16> to vector<32x128xbf16>
    %cst_13 = arith.constant dense<0.000000e+00> : vector<16x128xf32>
    %13 = tpu.matmul %10, %12, %cst_13 {dimension_numbers = #tpu.dot_dimension_numbers<[1], [0], [0], [1], [0, 0, 1, 1], [], []>} : vector<16x32xbf16>, vector<32x128xbf16>, vector<16x128xf32> -> vector<16x128xf32>
    %14 = vector.extract_strided_slice %9 {offsets = [0, 0], sizes = [16, 32], strides = [1, 1]} : vector<16x128xf32> to vector<16x32xf32>
    %15 = vector.extract_strided_slice %5 {offsets = [0, 0], sizes = [1, 32], strides = [1, 1]} : vector<12x32xf32> to vector<1x32xf32>
    %16 = vector.broadcast %15 : vector<1x32xf32> to vector<16x32xf32>
    %17 = arith.addf %14, %16 : vector<16x32xf32>
    %18 = vector.extract_strided_slice %9 {offsets = [0, 32], sizes = [16, 32], strides = [1, 1]} : vector<16x128xf32> to vector<16x32xf32>
    %19 = vector.extract_strided_slice %5 {offsets = [1, 0], sizes = [1, 32], strides = [1, 1]} : vector<12x32xf32> to vector<1x32xf32>
    %20 = vector.broadcast %19 : vector<1x32xf32> to vector<16x32xf32>
    %21 = arith.addf %18, %20 : vector<16x32xf32>
    %22 = vector.extract_strided_slice %9 {offsets = [0, 64], sizes = [16, 32], strides = [1, 1]} : vector<16x128xf32> to vector<16x32xf32>
    %23 = vector.extract_strided_slice %5 {offsets = [2, 0], sizes = [1, 32], strides = [1, 1]} : vector<12x32xf32> to vector<1x32xf32>
    %24 = vector.broadcast %23 : vector<1x32xf32> to vector<16x32xf32>
    %25 = arith.addf %22, %24 : vector<16x32xf32>
    %26 = vector.extract_strided_slice %13 {offsets = [0, 0], sizes = [16, 32], strides = [1, 1]} : vector<16x128xf32> to vector<16x32xf32>
    %27 = vector.extract_strided_slice %5 {offsets = [3, 0], sizes = [1, 32], strides = [1, 1]} : vector<12x32xf32> to vector<1x32xf32>
    %28 = vector.broadcast %27 : vector<1x32xf32> to vector<16x32xf32>
    %29 = arith.addf %26, %28 : vector<16x32xf32>
    %30 = vector.extract_strided_slice %13 {offsets = [0, 32], sizes = [16, 32], strides = [1, 1]} : vector<16x128xf32> to vector<16x32xf32>
    %31 = vector.extract_strided_slice %5 {offsets = [4, 0], sizes = [1, 32], strides = [1, 1]} : vector<12x32xf32> to vector<1x32xf32>
    %32 = vector.broadcast %31 : vector<1x32xf32> to vector<16x32xf32>
    %33 = arith.addf %30, %32 : vector<16x32xf32>
    %34 = vector.extract_strided_slice %13 {offsets = [0, 64], sizes = [16, 32], strides = [1, 1]} : vector<16x128xf32> to vector<16x32xf32>
    %35 = vector.extract_strided_slice %5 {offsets = [5, 0], sizes = [1, 32], strides = [1, 1]} : vector<12x32xf32> to vector<1x32xf32>
    %36 = vector.broadcast %35 : vector<1x32xf32> to vector<16x32xf32>
    %37 = arith.addf %34, %36 : vector<16x32xf32>
    %38 = tpu.concatenate %17, %29 in 0 : vector<16x32xf32>, vector<16x32xf32> -> vector<32x32xf32>
    %39 = arith.truncf %38 : vector<32x32xf32> to vector<32x32xbf16>
    %40 = tpu.concatenate %33, %21 in 0 : vector<16x32xf32>, vector<16x32xf32> -> vector<32x32xf32>
    %41 = arith.truncf %40 : vector<32x32xf32> to vector<32x32xbf16>
    %42 = tpu.concatenate %37, %25 in 0 : vector<16x32xf32>, vector<16x32xf32> -> vector<32x32xf32>
    %43 = arith.truncf %42 : vector<32x32xf32> to vector<32x32xbf16>
    %44 = vector.extract_strided_slice %39 {offsets = [0, 0], sizes = [32, 8], strides = [1, 1]} : vector<32x32xbf16> to vector<32x8xbf16>
    %45 = vector.extract_strided_slice %41 {offsets = [0, 0], sizes = [32, 8], strides = [1, 1]} : vector<32x32xbf16> to vector<32x8xbf16>
    %cst_14 = arith.constant dense<0.000000e+00> : vector<32x32xf32>
    %46 = tpu.matmul %44, %45, %cst_14 {dimension_numbers = #tpu.dot_dimension_numbers<[1], [1], [0], [0], [0, 0, 1, 0], [], []>} : vector<32x8xbf16>, vector<32x8xbf16>, vector<32x32xf32> -> vector<32x32xf32>
    %47 = arith.addf %46, %3 : vector<32x32xf32>
    %cst_15 = arith.constant dense<0xFF800000> : vector<32xf32>
    %48 = vector.multi_reduction <maximumf>, %47, %cst_15 [1] : vector<32x32xf32> to vector<32xf32>
    %49 = vector.shape_cast %48 : vector<32xf32> to vector<32x1xf32>
    %50 = vector.broadcast %49 : vector<32x1xf32> to vector<32x32xf32>
    %51 = arith.subf %47, %50 : vector<32x32xf32>
    %52 = math.exp %51 : vector<32x32xf32>
    %cst_16 = arith.constant dense<0.000000e+00> : vector<32xf32>
    %53 = vector.multi_reduction <add>, %52, %cst_16 [1] : vector<32x32xf32> to vector<32xf32>
    %54 = vector.shape_cast %53 : vector<32xf32> to vector<32x1xf32>
    %55 = tpu.reciprocal %54 {approx = true} : vector<32x1xf32> -> vector<32x1xf32>
    %56 = vector.broadcast %55 : vector<32x1xf32> to vector<32x32xf32>
    %57 = arith.mulf %52, %56 : vector<32x32xf32>
    %58 = arith.truncf %57 : vector<32x32xf32> to vector<32x32xbf16>
    %59 = vector.extract_strided_slice %43 {offsets = [0, 0], sizes = [32, 8], strides = [1, 1]} : vector<32x32xbf16> to vector<32x8xbf16>
    %cst_17 = arith.constant dense<0.000000e+00> : vector<32x8xf32>
    %60 = tpu.matmul %58, %59, %cst_17 {dimension_numbers = #tpu.dot_dimension_numbers<[1], [0], [0], [1], [0, 0, 1, 1], [], []>} : vector<32x32xbf16>, vector<32x8xbf16>, vector<32x8xf32> -> vector<32x8xf32>
    %61 = vector.extract_strided_slice %39 {offsets = [0, 8], sizes = [32, 8], strides = [1, 1]} : vector<32x32xbf16> to vector<32x8xbf16>
    %62 = vector.extract_strided_slice %41 {offsets = [0, 8], sizes = [32, 8], strides = [1, 1]} : vector<32x32xbf16> to vector<32x8xbf16>
    %cst_18 = arith.constant dense<0.000000e+00> : vector<32x32xf32>
    %63 = tpu.matmul %61, %62, %cst_18 {dimension_numbers = #tpu.dot_dimension_numbers<[1], [1], [0], [0], [0, 0, 1, 0], [], []>} : vector<32x8xbf16>, vector<32x8xbf16>, vector<32x32xf32> -> vector<32x32xf32>
    %64 = arith.addf %63, %3 : vector<32x32xf32>
    %cst_19 = arith.constant dense<0xFF800000> : vector<32xf32>
    %65 = vector.multi_reduction <maximumf>, %64, %cst_19 [1] : vector<32x32xf32> to vector<32xf32>
    %66 = vector.shape_cast %65 : vector<32xf32> to vector<32x1xf32>
    %67 = vector.broadcast %66 : vector<32x1xf32> to vector<32x32xf32>
    %68 = arith.subf %64, %67 : vector<32x32xf32>
    %69 = math.exp %68 : vector<32x32xf32>
    %cst_20 = arith.constant dense<0.000000e+00> : vector<32xf32>
    %70 = vector.multi_reduction <add>, %69, %cst_20 [1] : vector<32x32xf32> to vector<32xf32>
    %71 = vector.shape_cast %70 : vector<32xf32> to vector<32x1xf32>
    %72 = tpu.reciprocal %71 {approx = true} : vector<32x1xf32> -> vector<32x1xf32>
    %73 = vector.broadcast %72 : vector<32x1xf32> to vector<32x32xf32>
    %74 = arith.mulf %69, %73 : vector<32x32xf32>
    %75 = arith.truncf %74 : vector<32x32xf32> to vector<32x32xbf16>
    %76 = vector.extract_strided_slice %43 {offsets = [0, 8], sizes = [32, 8], strides = [1, 1]} : vector<32x32xbf16> to vector<32x8xbf16>
    %cst_21 = arith.constant dense<0.000000e+00> : vector<32x8xf32>
    %77 = tpu.matmul %75, %76, %cst_21 {dimension_numbers = #tpu.dot_dimension_numbers<[1], [0], [0], [1], [0, 0, 1, 1], [], []>} : vector<32x32xbf16>, vector<32x8xbf16>, vector<32x8xf32> -> vector<32x8xf32>
    %78 = vector.extract_strided_slice %39 {offsets = [0, 16], sizes = [32, 8], strides = [1, 1]} : vector<32x32xbf16> to vector<32x8xbf16>
    %79 = vector.extract_strided_slice %41 {offsets = [0, 16], sizes = [32, 8], strides = [1, 1]} : vector<32x32xbf16> to vector<32x8xbf16>
    %cst_22 = arith.constant dense<0.000000e+00> : vector<32x32xf32>
    %80 = tpu.matmul %78, %79, %cst_22 {dimension_numbers = #tpu.dot_dimension_numbers<[1], [1], [0], [0], [0, 0, 1, 0], [], []>} : vector<32x8xbf16>, vector<32x8xbf16>, vector<32x32xf32> -> vector<32x32xf32>
    %81 = arith.addf %80, %3 : vector<32x32xf32>
    %cst_23 = arith.constant dense<0xFF800000> : vector<32xf32>
    %82 = vector.multi_reduction <maximumf>, %81, %cst_23 [1] : vector<32x32xf32> to vector<32xf32>
    %83 = vector.shape_cast %82 : vector<32xf32> to vector<32x1xf32>
    %84 = vector.broadcast %83 : vector<32x1xf32> to vector<32x32xf32>
    %85 = arith.subf %81, %84 : vector<32x32xf32>
    %86 = math.exp %85 : vector<32x32xf32>
    %cst_24 = arith.constant dense<0.000000e+00> : vector<32xf32>
    %87 = vector.multi_reduction <add>, %86, %cst_24 [1] : vector<32x32xf32> to vector<32xf32>
    %88 = vector.shape_cast %87 : vector<32xf32> to vector<32x1xf32>
    %89 = tpu.reciprocal %88 {approx = true} : vector<32x1xf32> -> vector<32x1xf32>
    %90 = vector.broadcast %89 : vector<32x1xf32> to vector<32x32xf32>
    %91 = arith.mulf %86, %90 : vector<32x32xf32>
    %92 = arith.truncf %91 : vector<32x32xf32> to vector<32x32xbf16>
    %93 = vector.extract_strided_slice %43 {offsets = [0, 16], sizes = [32, 8], strides = [1, 1]} : vector<32x32xbf16> to vector<32x8xbf16>
    %cst_25 = arith.constant dense<0.000000e+00> : vector<32x8xf32>
    %94 = tpu.matmul %92, %93, %cst_25 {dimension_numbers = #tpu.dot_dimension_numbers<[1], [0], [0], [1], [0, 0, 1, 1], [], []>} : vector<32x32xbf16>, vector<32x8xbf16>, vector<32x8xf32> -> vector<32x8xf32>
    %95 = vector.extract_strided_slice %39 {offsets = [0, 24], sizes = [32, 8], strides = [1, 1]} : vector<32x32xbf16> to vector<32x8xbf16>
    %96 = vector.extract_strided_slice %41 {offsets = [0, 24], sizes = [32, 8], strides = [1, 1]} : vector<32x32xbf16> to vector<32x8xbf16>
    %cst_26 = arith.constant dense<0.000000e+00> : vector<32x32xf32>
    %97 = tpu.matmul %95, %96, %cst_26 {dimension_numbers = #tpu.dot_dimension_numbers<[1], [1], [0], [0], [0, 0, 1, 0], [], []>} : vector<32x8xbf16>, vector<32x8xbf16>, vector<32x32xf32> -> vector<32x32xf32>
    %98 = arith.addf %97, %3 : vector<32x32xf32>
    %cst_27 = arith.constant dense<0xFF800000> : vector<32xf32>
    %99 = vector.multi_reduction <maximumf>, %98, %cst_27 [1] : vector<32x32xf32> to vector<32xf32>
    %100 = vector.shape_cast %99 : vector<32xf32> to vector<32x1xf32>
    %101 = vector.broadcast %100 : vector<32x1xf32> to vector<32x32xf32>
    %102 = arith.subf %98, %101 : vector<32x32xf32>
    %103 = math.exp %102 : vector<32x32xf32>
    %cst_28 = arith.constant dense<0.000000e+00> : vector<32xf32>
    %104 = vector.multi_reduction <add>, %103, %cst_28 [1] : vector<32x32xf32> to vector<32xf32>
    %105 = vector.shape_cast %104 : vector<32xf32> to vector<32x1xf32>
    %106 = tpu.reciprocal %105 {approx = true} : vector<32x1xf32> -> vector<32x1xf32>
    %107 = vector.broadcast %106 : vector<32x1xf32> to vector<32x32xf32>
    %108 = arith.mulf %103, %107 : vector<32x32xf32>
    %109 = arith.truncf %108 : vector<32x32xf32> to vector<32x32xbf16>
    %110 = vector.extract_strided_slice %43 {offsets = [0, 24], sizes = [32, 8], strides = [1, 1]} : vector<32x32xbf16> to vector<32x8xbf16>
    %cst_29 = arith.constant dense<0.000000e+00> : vector<32x8xf32>
    %111 = tpu.matmul %109, %110, %cst_29 {dimension_numbers = #tpu.dot_dimension_numbers<[1], [0], [0], [1], [0, 0, 1, 1], [], []>} : vector<32x32xbf16>, vector<32x8xbf16>, vector<32x8xf32> -> vector<32x8xf32>
    %112 = tpu.concatenate %60, %77, %94, %111 in 1 : vector<32x8xf32>, vector<32x8xf32>, vector<32x8xf32>, vector<32x8xf32> -> vector<32x32xf32>
    %113 = vector.extract_strided_slice %112 {offsets = [0, 0], sizes = [16, 32], strides = [1, 1]} : vector<32x32xf32> to vector<16x32xf32>
    %114 = arith.truncf %113 : vector<16x32xf32> to vector<16x32xbf16>
    %c0_30 = arith.constant 0 : index
    %c0_31 = arith.constant 0 : index
    %c0_32 = arith.constant 0 : index
    %c0_33 = arith.constant 0 : index
    %115 = vector.load %arg3[%c0_30, %c0_31, %c0_32, %c0_33] : memref<2x2x32x32xbf16, #tpu.memory_space<vmem>>, vector<1x1x32x32xbf16>
    %116 = vector.shape_cast %115 : vector<1x1x32x32xbf16> to vector<32x32xbf16>
    %cst_34 = arith.constant dense<0.000000e+00> : vector<16x32xf32>
    %117 = tpu.matmul %114, %116, %cst_34 {dimension_numbers = #tpu.dot_dimension_numbers<[1], [0], [0], [1], [0, 0, 1, 1], [], []>} : vector<16x32xbf16>, vector<32x32xbf16>, vector<16x32xf32> -> vector<16x32xf32>
    %118 = vector.extract_strided_slice %5 {offsets = [6, 0], sizes = [1, 32], strides = [1, 1]} : vector<12x32xf32> to vector<1x32xf32>
    %119 = vector.broadcast %118 : vector<1x32xf32> to vector<16x32xf32>
    %120 = arith.addf %117, %119 : vector<16x32xf32>
    %121 = vector.extract_strided_slice %112 {offsets = [16, 0], sizes = [16, 32], strides = [1, 1]} : vector<32x32xf32> to vector<16x32xf32>
    %122 = arith.truncf %121 : vector<16x32xf32> to vector<16x32xbf16>
    %c0_35 = arith.constant 0 : index
    %c1_36 = arith.constant 1 : index
    %c0_37 = arith.constant 0 : index
    %c0_38 = arith.constant 0 : index
    %123 = vector.load %arg3[%c0_35, %c1_36, %c0_37, %c0_38] : memref<2x2x32x32xbf16, #tpu.memory_space<vmem>>, vector<1x1x32x32xbf16>
    %124 = vector.shape_cast %123 : vector<1x1x32x32xbf16> to vector<32x32xbf16>
    %cst_39 = arith.constant dense<0.000000e+00> : vector<16x32xf32>
    %125 = tpu.matmul %122, %124, %cst_39 {dimension_numbers = #tpu.dot_dimension_numbers<[1], [0], [0], [1], [0, 0, 1, 1], [], []>} : vector<16x32xbf16>, vector<32x32xbf16>, vector<16x32xf32> -> vector<16x32xf32>
    %126 = vector.extract_strided_slice %5 {offsets = [7, 0], sizes = [1, 32], strides = [1, 1]} : vector<12x32xf32> to vector<1x32xf32>
    %127 = vector.broadcast %126 : vector<1x32xf32> to vector<16x32xf32>
    %128 = arith.addf %125, %127 : vector<16x32xf32>
    %129 = vector.extract_strided_slice %5 {offsets = [8, 0], sizes = [1, 32], strides = [1, 1]} : vector<12x32xf32> to vector<1x32xf32>
    %130 = vector.extract_strided_slice %5 {offsets = [9, 0], sizes = [1, 32], strides = [1, 1]} : vector<12x32xf32> to vector<1x32xf32>
    %cst_40 = arith.constant dense<0.000000e+00> : vector<16xf32>
    %131 = vector.multi_reduction <add>, %128, %cst_40 [1] : vector<16x32xf32> to vector<16xf32>
    %132 = vector.shape_cast %131 : vector<16xf32> to vector<16x1xf32>
    %cst_41 = arith.constant 3.200000e+01 : f32
    %133 = vector.broadcast %cst_41 : f32 to vector<16x1xf32>
    %134 = arith.divf %132, %133 : vector<16x1xf32>
    %135 = vector.broadcast %134 : vector<16x1xf32> to vector<16x32xf32>
    %136 = arith.subf %128, %135 : vector<16x32xf32>
    %137 = arith.mulf %136, %136 : vector<16x32xf32>
    %cst_42 = arith.constant dense<0.000000e+00> : vector<16xf32>
    %138 = vector.multi_reduction <add>, %137, %cst_42 [1] : vector<16x32xf32> to vector<16xf32>
    %139 = vector.shape_cast %138 : vector<16xf32> to vector<16x1xf32>
    %cst_43 = arith.constant 3.200000e+01 : f32
    %140 = vector.broadcast %cst_43 : f32 to vector<16x1xf32>
    %141 = arith.divf %139, %140 : vector<16x1xf32>
    %142 = vector.broadcast %134 : vector<16x1xf32> to vector<16x32xf32>
    %143 = arith.subf %128, %142 : vector<16x32xf32>
    %cst_44 = arith.constant 9.99999974E-6 : f32
    %144 = vector.broadcast %cst_44 : f32 to vector<16x1xf32>
    %145 = arith.addf %141, %144 : vector<16x1xf32>
    %146 = math.rsqrt %145 : vector<16x1xf32>
    %147 = vector.broadcast %146 : vector<16x1xf32> to vector<16x32xf32>
    %148 = arith.mulf %143, %147 : vector<16x32xf32>
    %149 = vector.broadcast %129 : vector<1x32xf32> to vector<16x32xf32>
    %150 = arith.mulf %148, %149 : vector<16x32xf32>
    %151 = vector.broadcast %130 : vector<1x32xf32> to vector<16x32xf32>
    %152 = arith.addf %150, %151 : vector<16x32xf32>
    %153 = arith.addf %1, %152 : vector<16x32xf32>
    %154 = vector.extract_strided_slice %5 {offsets = [10, 0], sizes = [1, 32], strides = [1, 1]} : vector<12x32xf32> to vector<1x32xf32>
    %155 = vector.extract_strided_slice %5 {offsets = [11, 0], sizes = [1, 32], strides = [1, 1]} : vector<12x32xf32> to vector<1x32xf32>
    %cst_45 = arith.constant dense<0.000000e+00> : vector<16xf32>
    %156 = vector.multi_reduction <add>, %120, %cst_45 [1] : vector<16x32xf32> to vector<16xf32>
    %157 = vector.shape_cast %156 : vector<16xf32> to vector<16x1xf32>
    %cst_46 = arith.constant 3.200000e+01 : f32
    %158 = vector.broadcast %cst_46 : f32 to vector<16x1xf32>
    %159 = arith.divf %157, %158 : vector<16x1xf32>
    %160 = vector.broadcast %159 : vector<16x1xf32> to vector<16x32xf32>
    %161 = arith.subf %120, %160 : vector<16x32xf32>
    %162 = arith.mulf %161, %161 : vector<16x32xf32>
    %cst_47 = arith.constant dense<0.000000e+00> : vector<16xf32>
    %163 = vector.multi_reduction <add>, %162, %cst_47 [1] : vector<16x32xf32> to vector<16xf32>
    %164 = vector.shape_cast %163 : vector<16xf32> to vector<16x1xf32>
    %cst_48 = arith.constant 3.200000e+01 : f32
    %165 = vector.broadcast %cst_48 : f32 to vector<16x1xf32>
    %166 = arith.divf %164, %165 : vector<16x1xf32>
    %167 = vector.broadcast %159 : vector<16x1xf32> to vector<16x32xf32>
    %168 = arith.subf %120, %167 : vector<16x32xf32>
    %cst_49 = arith.constant 9.99999974E-6 : f32
    %169 = vector.broadcast %cst_49 : f32 to vector<16x1xf32>
    %170 = arith.addf %166, %169 : vector<16x1xf32>
    %171 = math.rsqrt %170 : vector<16x1xf32>
    %172 = vector.broadcast %171 : vector<16x1xf32> to vector<16x32xf32>
    %173 = arith.mulf %168, %172 : vector<16x32xf32>
    %174 = vector.broadcast %154 : vector<1x32xf32> to vector<16x32xf32>
    %175 = arith.mulf %173, %174 : vector<16x32xf32>
    %176 = vector.broadcast %155 : vector<1x32xf32> to vector<16x32xf32>
    %177 = arith.addf %175, %176 : vector<16x32xf32>
    %178 = arith.addf %2, %177 : vector<16x32xf32>
    %c1_50 = arith.constant 1 : index
    %c0_51 = arith.constant 0 : index
    %c0_52 = arith.constant 0 : index
    %179 = vector.load %arg4[%c1_50, %c0_51, %c0_52] : memref<2x12x32xf32, #tpu.memory_space<vmem>>, vector<1x12x32xf32>
    %180 = vector.shape_cast %179 : vector<1x12x32xf32> to vector<12x32xf32>
    %181 = arith.truncf %153 : vector<16x32xf32> to vector<16x32xbf16>
    %c1_53 = arith.constant 1 : index
    %c0_54 = arith.constant 0 : index
    %c0_55 = arith.constant 0 : index
    %c0_56 = arith.constant 0 : index
    %182 = vector.load %arg2[%c1_53, %c0_54, %c0_55, %c0_56] : memref<2x2x32x128xbf16, #tpu.memory_space<vmem>>, vector<1x1x32x128xbf16>
    %183 = vector.shape_cast %182 : vector<1x1x32x128xbf16> to vector<32x128xbf16>
    %cst_57 = arith.constant dense<0.000000e+00> : vector<16x128xf32>
    %184 = tpu.matmul %181, %183, %cst_57 {dimension_numbers = #tpu.dot_dimension_numbers<[1], [0], [0], [1], [0, 0, 1, 1], [], []>} : vector<16x32xbf16>, vector<32x128xbf16>, vector<16x128xf32> -> vector<16x128xf32>
    %185 = arith.truncf %178 : vector<16x32xf32> to vector<16x32xbf16>
    %c1_58 = arith.constant 1 : index
    %c1_59 = arith.constant 1 : index
    %c0_60 = arith.constant 0 : index
    %c0_61 = arith.constant 0 : index
    %186 = vector.load %arg2[%c1_58, %c1_59, %c0_60, %c0_61] : memref<2x2x32x128xbf16, #tpu.memory_space<vmem>>, vector<1x1x32x128xbf16>
    %187 = vector.shape_cast %186 : vector<1x1x32x128xbf16> to vector<32x128xbf16>
    %cst_62 = arith.constant dense<0.000000e+00> : vector<16x128xf32>
    %188 = tpu.matmul %185, %187, %cst_62 {dimension_numbers = #tpu.dot_dimension_numbers<[1], [0], [0], [1], [0, 0, 1, 1], [], []>} : vector<16x32xbf16>, vector<32x128xbf16>, vector<16x128xf32> -> vector<16x128xf32>
    %189 = vector.extract_strided_slice %184 {offsets = [0, 0], sizes = [16, 32], strides = [1, 1]} : vector<16x128xf32> to vector<16x32xf32>
    %190 = vector.extract_strided_slice %180 {offsets = [0, 0], sizes = [1, 32], strides = [1, 1]} : vector<12x32xf32> to vector<1x32xf32>
    %191 = vector.broadcast %190 : vector<1x32xf32> to vector<16x32xf32>
    %192 = arith.addf %189, %191 : vector<16x32xf32>
    %193 = vector.extract_strided_slice %184 {offsets = [0, 32], sizes = [16, 32], strides = [1, 1]} : vector<16x128xf32> to vector<16x32xf32>
    %194 = vector.extract_strided_slice %180 {offsets = [1, 0], sizes = [1, 32], strides = [1, 1]} : vector<12x32xf32> to vector<1x32xf32>
    %195 = vector.broadcast %194 : vector<1x32xf32> to vector<16x32xf32>
    %196 = arith.addf %193, %195 : vector<16x32xf32>
    %197 = vector.extract_strided_slice %184 {offsets = [0, 64], sizes = [16, 32], strides = [1, 1]} : vector<16x128xf32> to vector<16x32xf32>
    %198 = vector.extract_strided_slice %180 {offsets = [2, 0], sizes = [1, 32], strides = [1, 1]} : vector<12x32xf32> to vector<1x32xf32>
    %199 = vector.broadcast %198 : vector<1x32xf32> to vector<16x32xf32>
    %200 = arith.addf %197, %199 : vector<16x32xf32>
    %201 = vector.extract_strided_slice %188 {offsets = [0, 0], sizes = [16, 32], strides = [1, 1]} : vector<16x128xf32> to vector<16x32xf32>
    %202 = vector.extract_strided_slice %180 {offsets = [3, 0], sizes = [1, 32], strides = [1, 1]} : vector<12x32xf32> to vector<1x32xf32>
    %203 = vector.broadcast %202 : vector<1x32xf32> to vector<16x32xf32>
    %204 = arith.addf %201, %203 : vector<16x32xf32>
    %205 = vector.extract_strided_slice %188 {offsets = [0, 32], sizes = [16, 32], strides = [1, 1]} : vector<16x128xf32> to vector<16x32xf32>
    %206 = vector.extract_strided_slice %180 {offsets = [4, 0], sizes = [1, 32], strides = [1, 1]} : vector<12x32xf32> to vector<1x32xf32>
    %207 = vector.broadcast %206 : vector<1x32xf32> to vector<16x32xf32>
    %208 = arith.addf %205, %207 : vector<16x32xf32>
    %209 = vector.extract_strided_slice %188 {offsets = [0, 64], sizes = [16, 32], strides = [1, 1]} : vector<16x128xf32> to vector<16x32xf32>
    %210 = vector.extract_strided_slice %180 {offsets = [5, 0], sizes = [1, 32], strides = [1, 1]} : vector<12x32xf32> to vector<1x32xf32>
    %211 = vector.broadcast %210 : vector<1x32xf32> to vector<16x32xf32>
    %212 = arith.addf %209, %211 : vector<16x32xf32>
    %213 = tpu.concatenate %192, %204 in 0 : vector<16x32xf32>, vector<16x32xf32> -> vector<32x32xf32>
    %214 = arith.truncf %213 : vector<32x32xf32> to vector<32x32xbf16>
    %215 = tpu.concatenate %208, %196 in 0 : vector<16x32xf32>, vector<16x32xf32> -> vector<32x32xf32>
    %216 = arith.truncf %215 : vector<32x32xf32> to vector<32x32xbf16>
    %217 = tpu.concatenate %212, %200 in 0 : vector<16x32xf32>, vector<16x32xf32> -> vector<32x32xf32>
    %218 = arith.truncf %217 : vector<32x32xf32> to vector<32x32xbf16>
    %219 = vector.extract_strided_slice %214 {offsets = [0, 0], sizes = [32, 8], strides = [1, 1]} : vector<32x32xbf16> to vector<32x8xbf16>
    %220 = vector.extract_strided_slice %216 {offsets = [0, 0], sizes = [32, 8], strides = [1, 1]} : vector<32x32xbf16> to vector<32x8xbf16>
    %cst_63 = arith.constant dense<0.000000e+00> : vector<32x32xf32>
    %221 = tpu.matmul %219, %220, %cst_63 {dimension_numbers = #tpu.dot_dimension_numbers<[1], [1], [0], [0], [0, 0, 1, 0], [], []>} : vector<32x8xbf16>, vector<32x8xbf16>, vector<32x32xf32> -> vector<32x32xf32>
    %222 = arith.addf %221, %3 : vector<32x32xf32>
    %cst_64 = arith.constant dense<0xFF800000> : vector<32xf32>
    %223 = vector.multi_reduction <maximumf>, %222, %cst_64 [1] : vector<32x32xf32> to vector<32xf32>
    %224 = vector.shape_cast %223 : vector<32xf32> to vector<32x1xf32>
    %225 = vector.broadcast %224 : vector<32x1xf32> to vector<32x32xf32>
    %226 = arith.subf %222, %225 : vector<32x32xf32>
    %227 = math.exp %226 : vector<32x32xf32>
    %cst_65 = arith.constant dense<0.000000e+00> : vector<32xf32>
    %228 = vector.multi_reduction <add>, %227, %cst_65 [1] : vector<32x32xf32> to vector<32xf32>
    %229 = vector.shape_cast %228 : vector<32xf32> to vector<32x1xf32>
    %230 = tpu.reciprocal %229 {approx = true} : vector<32x1xf32> -> vector<32x1xf32>
    %231 = vector.broadcast %230 : vector<32x1xf32> to vector<32x32xf32>
    %232 = arith.mulf %227, %231 : vector<32x32xf32>
    %233 = arith.truncf %232 : vector<32x32xf32> to vector<32x32xbf16>
    %234 = vector.extract_strided_slice %218 {offsets = [0, 0], sizes = [32, 8], strides = [1, 1]} : vector<32x32xbf16> to vector<32x8xbf16>
    %cst_66 = arith.constant dense<0.000000e+00> : vector<32x8xf32>
    %235 = tpu.matmul %233, %234, %cst_66 {dimension_numbers = #tpu.dot_dimension_numbers<[1], [0], [0], [1], [0, 0, 1, 1], [], []>} : vector<32x32xbf16>, vector<32x8xbf16>, vector<32x8xf32> -> vector<32x8xf32>
    %236 = vector.extract_strided_slice %214 {offsets = [0, 8], sizes = [32, 8], strides = [1, 1]} : vector<32x32xbf16> to vector<32x8xbf16>
    %237 = vector.extract_strided_slice %216 {offsets = [0, 8], sizes = [32, 8], strides = [1, 1]} : vector<32x32xbf16> to vector<32x8xbf16>
    %cst_67 = arith.constant dense<0.000000e+00> : vector<32x32xf32>
    %238 = tpu.matmul %236, %237, %cst_67 {dimension_numbers = #tpu.dot_dimension_numbers<[1], [1], [0], [0], [0, 0, 1, 0], [], []>} : vector<32x8xbf16>, vector<32x8xbf16>, vector<32x32xf32> -> vector<32x32xf32>
    %239 = arith.addf %238, %3 : vector<32x32xf32>
    %cst_68 = arith.constant dense<0xFF800000> : vector<32xf32>
    %240 = vector.multi_reduction <maximumf>, %239, %cst_68 [1] : vector<32x32xf32> to vector<32xf32>
    %241 = vector.shape_cast %240 : vector<32xf32> to vector<32x1xf32>
    %242 = vector.broadcast %241 : vector<32x1xf32> to vector<32x32xf32>
    %243 = arith.subf %239, %242 : vector<32x32xf32>
    %244 = math.exp %243 : vector<32x32xf32>
    %cst_69 = arith.constant dense<0.000000e+00> : vector<32xf32>
    %245 = vector.multi_reduction <add>, %244, %cst_69 [1] : vector<32x32xf32> to vector<32xf32>
    %246 = vector.shape_cast %245 : vector<32xf32> to vector<32x1xf32>
    %247 = tpu.reciprocal %246 {approx = true} : vector<32x1xf32> -> vector<32x1xf32>
    %248 = vector.broadcast %247 : vector<32x1xf32> to vector<32x32xf32>
    %249 = arith.mulf %244, %248 : vector<32x32xf32>
    %250 = arith.truncf %249 : vector<32x32xf32> to vector<32x32xbf16>
    %251 = vector.extract_strided_slice %218 {offsets = [0, 8], sizes = [32, 8], strides = [1, 1]} : vector<32x32xbf16> to vector<32x8xbf16>
    %cst_70 = arith.constant dense<0.000000e+00> : vector<32x8xf32>
    %252 = tpu.matmul %250, %251, %cst_70 {dimension_numbers = #tpu.dot_dimension_numbers<[1], [0], [0], [1], [0, 0, 1, 1], [], []>} : vector<32x32xbf16>, vector<32x8xbf16>, vector<32x8xf32> -> vector<32x8xf32>
    %253 = vector.extract_strided_slice %214 {offsets = [0, 16], sizes = [32, 8], strides = [1, 1]} : vector<32x32xbf16> to vector<32x8xbf16>
    %254 = vector.extract_strided_slice %216 {offsets = [0, 16], sizes = [32, 8], strides = [1, 1]} : vector<32x32xbf16> to vector<32x8xbf16>
    %cst_71 = arith.constant dense<0.000000e+00> : vector<32x32xf32>
    %255 = tpu.matmul %253, %254, %cst_71 {dimension_numbers = #tpu.dot_dimension_numbers<[1], [1], [0], [0], [0, 0, 1, 0], [], []>} : vector<32x8xbf16>, vector<32x8xbf16>, vector<32x32xf32> -> vector<32x32xf32>
    %256 = arith.addf %255, %3 : vector<32x32xf32>
    %cst_72 = arith.constant dense<0xFF800000> : vector<32xf32>
    %257 = vector.multi_reduction <maximumf>, %256, %cst_72 [1] : vector<32x32xf32> to vector<32xf32>
    %258 = vector.shape_cast %257 : vector<32xf32> to vector<32x1xf32>
    %259 = vector.broadcast %258 : vector<32x1xf32> to vector<32x32xf32>
    %260 = arith.subf %256, %259 : vector<32x32xf32>
    %261 = math.exp %260 : vector<32x32xf32>
    %cst_73 = arith.constant dense<0.000000e+00> : vector<32xf32>
    %262 = vector.multi_reduction <add>, %261, %cst_73 [1] : vector<32x32xf32> to vector<32xf32>
    %263 = vector.shape_cast %262 : vector<32xf32> to vector<32x1xf32>
    %264 = tpu.reciprocal %263 {approx = true} : vector<32x1xf32> -> vector<32x1xf32>
    %265 = vector.broadcast %264 : vector<32x1xf32> to vector<32x32xf32>
    %266 = arith.mulf %261, %265 : vector<32x32xf32>
    %267 = arith.truncf %266 : vector<32x32xf32> to vector<32x32xbf16>
    %268 = vector.extract_strided_slice %218 {offsets = [0, 16], sizes = [32, 8], strides = [1, 1]} : vector<32x32xbf16> to vector<32x8xbf16>
    %cst_74 = arith.constant dense<0.000000e+00> : vector<32x8xf32>
    %269 = tpu.matmul %267, %268, %cst_74 {dimension_numbers = #tpu.dot_dimension_numbers<[1], [0], [0], [1], [0, 0, 1, 1], [], []>} : vector<32x32xbf16>, vector<32x8xbf16>, vector<32x8xf32> -> vector<32x8xf32>
    %270 = vector.extract_strided_slice %214 {offsets = [0, 24], sizes = [32, 8], strides = [1, 1]} : vector<32x32xbf16> to vector<32x8xbf16>
    %271 = vector.extract_strided_slice %216 {offsets = [0, 24], sizes = [32, 8], strides = [1, 1]} : vector<32x32xbf16> to vector<32x8xbf16>
    %cst_75 = arith.constant dense<0.000000e+00> : vector<32x32xf32>
    %272 = tpu.matmul %270, %271, %cst_75 {dimension_numbers = #tpu.dot_dimension_numbers<[1], [1], [0], [0], [0, 0, 1, 0], [], []>} : vector<32x8xbf16>, vector<32x8xbf16>, vector<32x32xf32> -> vector<32x32xf32>
    %273 = arith.addf %272, %3 : vector<32x32xf32>
    %cst_76 = arith.constant dense<0xFF800000> : vector<32xf32>
    %274 = vector.multi_reduction <maximumf>, %273, %cst_76 [1] : vector<32x32xf32> to vector<32xf32>
    %275 = vector.shape_cast %274 : vector<32xf32> to vector<32x1xf32>
    %276 = vector.broadcast %275 : vector<32x1xf32> to vector<32x32xf32>
    %277 = arith.subf %273, %276 : vector<32x32xf32>
    %278 = math.exp %277 : vector<32x32xf32>
    %cst_77 = arith.constant dense<0.000000e+00> : vector<32xf32>
    %279 = vector.multi_reduction <add>, %278, %cst_77 [1] : vector<32x32xf32> to vector<32xf32>
    %280 = vector.shape_cast %279 : vector<32xf32> to vector<32x1xf32>
    %281 = tpu.reciprocal %280 {approx = true} : vector<32x1xf32> -> vector<32x1xf32>
    %282 = vector.broadcast %281 : vector<32x1xf32> to vector<32x32xf32>
    %283 = arith.mulf %278, %282 : vector<32x32xf32>
    %284 = arith.truncf %283 : vector<32x32xf32> to vector<32x32xbf16>
    %285 = vector.extract_strided_slice %218 {offsets = [0, 24], sizes = [32, 8], strides = [1, 1]} : vector<32x32xbf16> to vector<32x8xbf16>
    %cst_78 = arith.constant dense<0.000000e+00> : vector<32x8xf32>
    %286 = tpu.matmul %284, %285, %cst_78 {dimension_numbers = #tpu.dot_dimension_numbers<[1], [0], [0], [1], [0, 0, 1, 1], [], []>} : vector<32x32xbf16>, vector<32x8xbf16>, vector<32x8xf32> -> vector<32x8xf32>
    %287 = tpu.concatenate %235, %252, %269, %286 in 1 : vector<32x8xf32>, vector<32x8xf32>, vector<32x8xf32>, vector<32x8xf32> -> vector<32x32xf32>
    %288 = vector.extract_strided_slice %287 {offsets = [0, 0], sizes = [16, 32], strides = [1, 1]} : vector<32x32xf32> to vector<16x32xf32>
    %289 = arith.truncf %288 : vector<16x32xf32> to vector<16x32xbf16>
    %c1_79 = arith.constant 1 : index
    %c0_80 = arith.constant 0 : index
    %c0_81 = arith.constant 0 : index
    %c0_82 = arith.constant 0 : index
    %290 = vector.load %arg3[%c1_79, %c0_80, %c0_81, %c0_82] : memref<2x2x32x32xbf16, #tpu.memory_space<vmem>>, vector<1x1x32x32xbf16>
    %291 = vector.shape_cast %290 : vector<1x1x32x32xbf16> to vector<32x32xbf16>
    %cst_83 = arith.constant dense<0.000000e+00> : vector<16x32xf32>
    %292 = tpu.matmul %289, %291, %cst_83 {dimension_numbers = #tpu.dot_dimension_numbers<[1], [0], [0], [1], [0, 0, 1, 1], [], []>} : vector<16x32xbf16>, vector<32x32xbf16>, vector<16x32xf32> -> vector<16x32xf32>
    %293 = vector.extract_strided_slice %180 {offsets = [6, 0], sizes = [1, 32], strides = [1, 1]} : vector<12x32xf32> to vector<1x32xf32>
    %294 = vector.broadcast %293 : vector<1x32xf32> to vector<16x32xf32>
    %295 = arith.addf %292, %294 : vector<16x32xf32>
    %296 = vector.extract_strided_slice %287 {offsets = [16, 0], sizes = [16, 32], strides = [1, 1]} : vector<32x32xf32> to vector<16x32xf32>
    %297 = arith.truncf %296 : vector<16x32xf32> to vector<16x32xbf16>
    %c1_84 = arith.constant 1 : index
    %c1_85 = arith.constant 1 : index
    %c0_86 = arith.constant 0 : index
    %c0_87 = arith.constant 0 : index
    %298 = vector.load %arg3[%c1_84, %c1_85, %c0_86, %c0_87] : memref<2x2x32x32xbf16, #tpu.memory_space<vmem>>, vector<1x1x32x32xbf16>
    %299 = vector.shape_cast %298 : vector<1x1x32x32xbf16> to vector<32x32xbf16>
    %cst_88 = arith.constant dense<0.000000e+00> : vector<16x32xf32>
    %300 = tpu.matmul %297, %299, %cst_88 {dimension_numbers = #tpu.dot_dimension_numbers<[1], [0], [0], [1], [0, 0, 1, 1], [], []>} : vector<16x32xbf16>, vector<32x32xbf16>, vector<16x32xf32> -> vector<16x32xf32>
    %301 = vector.extract_strided_slice %180 {offsets = [7, 0], sizes = [1, 32], strides = [1, 1]} : vector<12x32xf32> to vector<1x32xf32>
    %302 = vector.broadcast %301 : vector<1x32xf32> to vector<16x32xf32>
    %303 = arith.addf %300, %302 : vector<16x32xf32>
    %304 = vector.extract_strided_slice %180 {offsets = [8, 0], sizes = [1, 32], strides = [1, 1]} : vector<12x32xf32> to vector<1x32xf32>
    %305 = vector.extract_strided_slice %180 {offsets = [9, 0], sizes = [1, 32], strides = [1, 1]} : vector<12x32xf32> to vector<1x32xf32>
    %cst_89 = arith.constant dense<0.000000e+00> : vector<16xf32>
    %306 = vector.multi_reduction <add>, %303, %cst_89 [1] : vector<16x32xf32> to vector<16xf32>
    %307 = vector.shape_cast %306 : vector<16xf32> to vector<16x1xf32>
    %cst_90 = arith.constant 3.200000e+01 : f32
    %308 = vector.broadcast %cst_90 : f32 to vector<16x1xf32>
    %309 = arith.divf %307, %308 : vector<16x1xf32>
    %310 = vector.broadcast %309 : vector<16x1xf32> to vector<16x32xf32>
    %311 = arith.subf %303, %310 : vector<16x32xf32>
    %312 = arith.mulf %311, %311 : vector<16x32xf32>
    %cst_91 = arith.constant dense<0.000000e+00> : vector<16xf32>
    %313 = vector.multi_reduction <add>, %312, %cst_91 [1] : vector<16x32xf32> to vector<16xf32>
    %314 = vector.shape_cast %313 : vector<16xf32> to vector<16x1xf32>
    %cst_92 = arith.constant 3.200000e+01 : f32
    %315 = vector.broadcast %cst_92 : f32 to vector<16x1xf32>
    %316 = arith.divf %314, %315 : vector<16x1xf32>
    %317 = vector.broadcast %309 : vector<16x1xf32> to vector<16x32xf32>
    %318 = arith.subf %303, %317 : vector<16x32xf32>
    %cst_93 = arith.constant 9.99999974E-6 : f32
    %319 = vector.broadcast %cst_93 : f32 to vector<16x1xf32>
    %320 = arith.addf %316, %319 : vector<16x1xf32>
    %321 = math.rsqrt %320 : vector<16x1xf32>
    %322 = vector.broadcast %321 : vector<16x1xf32> to vector<16x32xf32>
    %323 = arith.mulf %318, %322 : vector<16x32xf32>
    %324 = vector.broadcast %304 : vector<1x32xf32> to vector<16x32xf32>
    %325 = arith.mulf %323, %324 : vector<16x32xf32>
    %326 = vector.broadcast %305 : vector<1x32xf32> to vector<16x32xf32>
    %327 = arith.addf %325, %326 : vector<16x32xf32>
    %328 = arith.addf %153, %327 : vector<16x32xf32>
    %329 = vector.extract_strided_slice %180 {offsets = [10, 0], sizes = [1, 32], strides = [1, 1]} : vector<12x32xf32> to vector<1x32xf32>
    %330 = vector.extract_strided_slice %180 {offsets = [11, 0], sizes = [1, 32], strides = [1, 1]} : vector<12x32xf32> to vector<1x32xf32>
    %cst_94 = arith.constant dense<0.000000e+00> : vector<16xf32>
    %331 = vector.multi_reduction <add>, %295, %cst_94 [1] : vector<16x32xf32> to vector<16xf32>
    %332 = vector.shape_cast %331 : vector<16xf32> to vector<16x1xf32>
    %cst_95 = arith.constant 3.200000e+01 : f32
    %333 = vector.broadcast %cst_95 : f32 to vector<16x1xf32>
    %334 = arith.divf %332, %333 : vector<16x1xf32>
    %335 = vector.broadcast %334 : vector<16x1xf32> to vector<16x32xf32>
    %336 = arith.subf %295, %335 : vector<16x32xf32>
    %337 = arith.mulf %336, %336 : vector<16x32xf32>
    %cst_96 = arith.constant dense<0.000000e+00> : vector<16xf32>
    %338 = vector.multi_reduction <add>, %337, %cst_96 [1] : vector<16x32xf32> to vector<16xf32>
    %339 = vector.shape_cast %338 : vector<16xf32> to vector<16x1xf32>
    %cst_97 = arith.constant 3.200000e+01 : f32
    %340 = vector.broadcast %cst_97 : f32 to vector<16x1xf32>
    %341 = arith.divf %339, %340 : vector<16x1xf32>
    %342 = vector.broadcast %334 : vector<16x1xf32> to vector<16x32xf32>
    %343 = arith.subf %295, %342 : vector<16x32xf32>
    %cst_98 = arith.constant 9.99999974E-6 : f32
    %344 = vector.broadcast %cst_98 : f32 to vector<16x1xf32>
    %345 = arith.addf %341, %344 : vector<16x1xf32>
    %346 = math.rsqrt %345 : vector<16x1xf32>
    %347 = vector.broadcast %346 : vector<16x1xf32> to vector<16x32xf32>
    %348 = arith.mulf %343, %347 : vector<16x32xf32>
    %349 = vector.broadcast %329 : vector<1x32xf32> to vector<16x32xf32>
    %350 = arith.mulf %348, %349 : vector<16x32xf32>
    %351 = vector.broadcast %330 : vector<1x32xf32> to vector<16x32xf32>
    %352 = arith.addf %350, %351 : vector<16x32xf32>
    %353 = arith.addf %178, %352 : vector<16x32xf32>
    %354 = arith.addf %328, %353 : vector<16x32xf32>
    %cst_99 = arith.constant 5.000000e-01 : f32
    %355 = vector.broadcast %cst_99 : f32 to vector<16x32xf32>
    %356 = arith.mulf %355, %354 : vector<16x32xf32>
    %c0_100 = arith.constant 0 : index
    %c0_101 = arith.constant 0 : index
    %357 = vector.load %arg5[%c0_100, %c0_101] : memref<16x32xf32, #tpu.memory_space<vmem>>, vector<16x32xf32>
    tpu.vector_store %arg5[%c0_100, %c0_101], %356 {strides = array<i32>} : memref<16x32xf32, #tpu.memory_space<vmem>>, vector<16x32xf32>,
    return
  }
}

</mosaic_0001>

<llo_original>
// kernel: bidirectional_cross_attention.1
$region0: #{bidirectional_cross_attention.1}
  #allocation0 [shape = 'u32[]', space=smem, size = 0x4, offset = 0x4, fixed_abs, tag = 'smem constant byte address 0x4 - core index']
  #allocation1 [shape = 'u32[144,128]{1,0:T(1,128)}', space=vmem, size = 0x12000, scoped, tag = 'internal scratch']
  %s0 = inlined_call_operand.vmem [shape: f32[32,32], index: 0, kind: input, shape index: {}]
  %s1 = inlined_call_operand.vmem [shape: f32[32,32], index: 1, kind: input, shape index: {}]
  %s2 = inlined_call_operand.vmem [shape: bf16[2,2,32,128], index: 2, kind: input, shape index: {}]
  %s3 = inlined_call_operand.vmem [shape: bf16[2,2,32,32], index: 3, kind: input, shape index: {}]
  %s4 = inlined_call_operand.vmem [shape: f32[2,12,32], index: 4, kind: input, shape index: {}]
  %s5 = inlined_call_operand.hbm [shape: f32[16,32], index: 5, kind: output, shape index: {}]
  %s6 = sld [smem:[#allocation0]]
  $region30: #{bidirectional_cross_attention.1} parent=0
    _
  %s8 = ssub.s32 1, %s6
  %s9 = scalar_select 0, %s8, %s6
  $region1: #{bidirectional_cross_attention.1} parent=0
    #allocation2 [shape = 'u8[8192]{0}', space=vmem, size = 0x2000, scoped, tag = 'output window, operand 0, single buffered']
    #allocation3 [shape = 's32[1]{0}', space=sflag, size = 0x4, scoped, tag = 'scoped memory for bidirectional_cross_attention.1']
    %10 = vsyncpa [#allocation3], 0
    // Predicated region
    $region2: #{bidirectional_cross_attention.1} parent=1 // pred_check
      _
    $region3: #{bidirectional_cross_attention.1} parent=1 // pred_check_branch
      %12 = sbr.rel (0) target = $region5
    $region4: #{bidirectional_cross_attention.1} parent=1 // pred_region
      _
    $region5: #{bidirectional_cross_attention.1} parent=1 // pred_fallthru
      _
    // Predicated region
    $region6: #{bidirectional_cross_attention.1} parent=1 // pred_check
      _
    $region7: #{bidirectional_cross_attention.1} parent=1 // pred_check_branch
      %14 = sbr.rel (0) target = $region9
    $region8: #{bidirectional_cross_attention.1} parent=1 // pred_region
      _
    $region9: #{bidirectional_cross_attention.1} parent=1 // pred_fallthru
      _
    // Predicated region
    $region10: #{bidirectional_cross_attention.1} parent=1 // pred_check
      _
    $region11: #{bidirectional_cross_attention.1} parent=1 // pred_check_branch
      %16 = sbr.rel (0) target = $region13
    $region12: #{bidirectional_cross_attention.1} parent=1 // pred_region
      _
    $region13: #{bidirectional_cross_attention.1} parent=1 // pred_fallthru
      _
    // Predicated region
    $region14: #{bidirectional_cross_attention.1} parent=1 // pred_check
      _
    $region15: #{bidirectional_cross_attention.1} parent=1 // pred_check_branch
      %18 = sbr.rel (0) target = $region17
    $region16: #{bidirectional_cross_attention.1} parent=1 // pred_region
      _
    $region17: #{bidirectional_cross_attention.1} parent=1 // pred_fallthru
      _
    // Predicated region
    $region18: #{bidirectional_cross_attention.1} parent=1 // pred_check
      _
    $region19: #{bidirectional_cross_attention.1} parent=1 // pred_check_branch
      %20 = sbr.rel (0) target = $region21
    $region20: #{bidirectional_cross_attention.1} parent=1 // pred_region
      _
    $region21: #{bidirectional_cross_attention.1} parent=1 // pred_fallthru
      _
    %v22 = vld [vmem:[%s0] sm:$0xff]
    %v23 = vld [vmem:[%s0 + $0x8] sm:$0xff]
    %v24 = vld [vmem:[%s0 + $0x10] sm:$0xff]
    %v25 = vld [vmem:[%s0 + $0x18] sm:$0xff]
    %v26 = vld [vmem:[%s1] sm:$0xff]
    %v27 = vld [vmem:[%s1 + $0x8] sm:$0xff]
    %v28 = vld [vmem:[%s1 + $0x10] sm:$0xff]
    %v29 = vld [vmem:[%s1 + $0x18] sm:$0xff]
    %v30 = vld [vmem:[%s4] sm:$0xff]
    %v31 = vld [vmem:[%s4 + $0x8] sm:$0xf]
    %v32 = vpack.c.bf16 %v23, %v22
    %v33 = vld [vmem:[%s2] sm:$0xf]
    %v34 = vld [vmem:[%s2 + $0x4] sm:$0xf]
    %v35 = vld [vmem:[%s2 + $0x8] sm:$0xf]
    %v36 = vld [vmem:[%s2 + $0xc] sm:$0xf]
    %v41 = vunpack.c.l.b16 %v33
    %v42 = vunpack.c.l.b16 %v34
    %v43 = vunpack.c.l.b16 %v35
    %v44 = vunpack.c.l.b16 %v36
    %v45 = vpack.c.b16 %v42, %v41
    %v46 = vpack.c.b16 %v44, %v43
    %vm49 = vcmask 261120
    %v51 = vsel %vm49, %v32, 0
    %53 = vmatprep.subr.bf16.mxu0 0
    %54 = vmatpush1.bf16.msra.mxu0 0
    %55 = vmatprep.subr.bf16.mxu0 0
    %56 = vmatpush1.bf16.msra.mxu0 0
    %57 = vmatprep.subr.bf16.mxu0 0
    %58 = vmatpush1.bf16.msra.mxu0 0
    %59 = vmatprep.subr.bf16.mxu0 0
    %60 = vmatpush1.bf16.msra.mxu0 0
    %61 = vmatprep.subr.bf16.mxu0 0
    %62 = vmatpush1.bf16.msra.mxu0 0
    %63 = vmatprep.subr.bf16.mxu0 0
    %64 = vmatpush1.bf16.msra.mxu0 0
    %65 = vmatprep.subr.bf16.mxu0 0
    %66 = vmatpush1.bf16.msra.mxu0 %v46
    %67 = vmatprep.subr.bf16.mxu0 0
    %68 = vmatpush1.bf16.msra.mxu0 %v45
    %69 = vmatprep.subr.bf16.mxu0 0
    %70 = vmatpush2.bf16.msra.mxu0 0
    %71 = vmatprep.subr.bf16.mxu0 0
    %72 = vmatpush2.bf16.msra.mxu0 0
    %73 = vmatprep.subr.bf16.mxu0 0
    %74 = vmatpush2.bf16.msra.mxu0 0
    %75 = vmatprep.subr.bf16.mxu0 0
    %76 = vmatpush2.bf16.msra.mxu0 0
    %77 = vmatprep.subr.bf16.mxu0 0
    %78 = vmatpush2.bf16.msra.mxu0 0
    %79 = vmatprep.subr.bf16.mxu0 0
    %80 = vmatpush2.bf16.msra.mxu0 0
    %81 = vmatprep.subr.bf16.mxu0 0
    %82 = vmatpush2.bf16.msra.mxu0 0
    %83 = vmatprep.subr.bf16.mxu0 0
    %84 = vmatpush2.bf16.msra.mxu0 0
    %85 = vmatprep.mubr.bf16.mxu0 0
    %86 = vmatmul.mubr.bf16.gmra.mxu0 %v51
    %v87 = vpop.f32.mrf.mxu0
    %v88 = vadd.f32 0.0, %v87
    %v89 = vpop.f32.mrf.mxu0
    %v90 = vpop.f32.mrf.mxu0
    %v91 = vadd.f32 0.0, %v90
    %v92 = vpop.f32.mrf.mxu0
    %93 = vdwg.mxu0
    %v94 = vpack.c.bf16 %v25, %v24
    %s95 = scalar_lea.vmem %s2, 16
    %v96 = vld [vmem:[%s95] sm:$0xf]
    %v97 = vld [vmem:[%s95 + $0x4] sm:$0xf]
    %v98 = vld [vmem:[%s95 + $0x8] sm:$0xf]
    %v99 = vld [vmem:[%s95 + $0xc] sm:$0xf]
    %v104 = vunpack.c.l.b16 %v96
    %v105 = vunpack.c.l.b16 %v97
    %v106 = vunpack.c.l.b16 %v98
    %v107 = vunpack.c.l.b16 %v99
    %v108 = vpack.c.b16 %v105, %v104
    %v109 = vpack.c.b16 %v107, %v106
    %v113 = vsel %vm49, %v94, 0
    %115 = vmatprep.subr.bf16.mxu0 0
    %116 = vmatpush1.bf16.msra.mxu0 0
    %117 = vmatprep.subr.bf16.mxu0 0
    %118 = vmatpush1.bf16.msra.mxu0 0
    %119 = vmatprep.subr.bf16.mxu0 0
    %120 = vmatpush1.bf16.msra.mxu0 0
    %121 = vmatprep.subr.bf16.mxu0 0
    %122 = vmatpush1.bf16.msra.mxu0 0
    %123 = vmatprep.subr.bf16.mxu0 0
    %124 = vmatpush1.bf16.msra.mxu0 0
    %125 = vmatprep.subr.bf16.mxu0 0
    %126 = vmatpush1.bf16.msra.mxu0 0
    %127 = vmatprep.subr.bf16.mxu0 0
    %128 = vmatpush1.bf16.msra.mxu0 %v109
    %129 = vmatprep.subr.bf16.mxu0 0
    %130 = vmatpush1.bf16.msra.mxu0 %v108
    %131 = vmatprep.subr.bf16.mxu0 0
    %132 = vmatpush2.bf16.msra.mxu0 0
    %133 = vmatprep.subr.bf16.mxu0 0
    %134 = vmatpush2.bf16.msra.mxu0 0
    %135 = vmatprep.subr.bf16.mxu0 0
    %136 = vmatpush2.bf16.msra.mxu0 0
    %137 = vmatprep.subr.bf16.mxu0 0
    %138 = vmatpush2.bf16.msra.mxu0 0
    %139 = vmatprep.subr.bf16.mxu0 0
    %140 = vmatpush2.bf16.msra.mxu0 0
    %141 = vmatprep.subr.bf16.mxu0 0
    %142 = vmatpush2.bf16.msra.mxu0 0
    %143 = vmatprep.subr.bf16.mxu0 0
    %144 = vmatpush2.bf16.msra.mxu0 0
    %145 = vmatprep.subr.bf16.mxu0 0
    %146 = vmatpush2.bf16.msra.mxu0 0
    %147 = vmatprep.mubr.bf16.mxu0 0
    %148 = vmatmul.mubr.bf16.gmra.mxu0 %v113
    %v149 = vpop.f32.mrf.mxu0
    %v150 = vadd.f32 0.0, %v149
    %v151 = vpop.f32.mrf.mxu0
    %v152 = vpop.f32.mrf.mxu0
    %v153 = vadd.f32 0.0, %v152
    %v154 = vpop.f32.mrf.mxu0
    %155 = vdwg.mxu0
    %v156 = vlaneseq
    %v157 = vshrl.u32 %v156, 7
    %v158 = vsub.s32 0, %v157
    %v159 = vrot.slane %v30, %v158
    %v160 = vadd.f32 %v88, %v159
    %v161 = vadd.f32 %v91, %v159
    %v162 = vlaneseq
    %v163 = vshrl.u32 %v162, 7
    %v164 = vsub.s32 1, %v163
    %v165 = vrot.slane %v30, %v164
    %167 = vrot.lane.b32.xlu0 %v165, 32
    %v168 = vpop.permute.xlu0 %167
    %v170 = vadd.f32 %v88, %v168
    %v171 = vadd.f32 %v91, %v168
    %v172 = vlaneseq
    %v173 = vshrl.u32 %v172, 7
    %v174 = vsub.s32 2, %v173
    %v175 = vrot.slane %v30, %v174
    %177 = vrot.lane.b32.xlu0 %v175, 64
    %v178 = vpop.permute.xlu0 %177
    %v180 = vadd.f32 %v88, %v178
    %v181 = vadd.f32 %v91, %v178
    %v182 = vlaneseq
    %v183 = vshrl.u32 %v182, 7
    %v184 = vsub.s32 3, %v183
    %v185 = vrot.slane %v30, %v184
    %v186 = vadd.f32 %v150, %v185
    %v187 = vadd.f32 %v153, %v185
    %v188 = vlaneseq
    %v189 = vshrl.u32 %v188, 7
    %v190 = vsub.s32 4, %v189
    %v191 = vrot.slane %v30, %v190
    %193 = vrot.lane.b32.xlu0 %v191, 32
    %v194 = vpop.permute.xlu0 %193
    %v196 = vadd.f32 %v150, %v194
    %v197 = vadd.f32 %v153, %v194
    %v198 = vlaneseq
    %v199 = vshrl.u32 %v198, 7
    %v200 = vsub.s32 5, %v199
    %v201 = vrot.slane %v30, %v200
    %203 = vrot.lane.b32.xlu0 %v201, 64
    %v204 = vpop.permute.xlu0 %203
    %v206 = vadd.f32 %v150, %v204
    %v207 = vadd.f32 %v153, %v204
    %v208 = vpack.c.bf16 %v161, %v160
    %v209 = vpack.c.bf16 %v187, %v186
    %v210 = vpack.c.bf16 %v197, %v196
    %v211 = vpack.c.bf16 %v171, %v170
    %v212 = vpack.c.bf16 %v207, %v206
    %v213 = vpack.c.bf16 %v181, %v180
    %216 = vrot.lane.b32.xlu0 %v210, 96
    %v217 = vpop.permute.xlu0 %216
    %218 = vrot.lane.b32.xlu0 %v211, 96
    %v219 = vpop.permute.xlu0 %218
    %vm220 = vcmask 64512
    %v222 = vsel %vm220, %v208, 0
    %v225 = vsel %vm220, %v209, 0
    %v228 = vsel %vm220, %v217, 0
    %v231 = vsel %vm220, %v219, 0
    %233 = vmatprep.subr.bf16.mxu0 0
    %234 = vmatpush1.bf16.xpose.msra.mxu0 0
    %235 = vmatprep.subr.bf16.mxu0 0
    %236 = vmatpush1.bf16.xpose.msra.mxu0 0
    %237 = vmatprep.subr.bf16.mxu0 0
    %238 = vmatpush1.bf16.xpose.msra.mxu0 0
    %239 = vmatprep.subr.bf16.mxu0 0
    %240 = vmatpush1.bf16.xpose.msra.mxu0 0
    %241 = vmatprep.subr.bf16.mxu0 0
    %242 = vmatpush1.bf16.xpose.msra.mxu0 0
    %243 = vmatprep.subr.bf16.mxu0 0
    %244 = vmatpush1.bf16.xpose.msra.mxu0 0
    %245 = vmatprep.subr.bf16.mxu0 0
    %246 = vmatpush1.bf16.xpose.msra.mxu0 %v231
    %247 = vmatprep.subr.bf16.mxu0 0
    %248 = vmatpush1.bf16.xpose.msra.mxu0 %v228
    %249 = vmatprep.subr.bf16.mxu0 0
    %250 = vmatpush2.bf16.xpose.msra.mxu0 0
    %251 = vmatprep.subr.bf16.mxu0 0
    %252 = vmatpush2.bf16.xpose.msra.mxu0 0
    %253 = vmatprep.subr.bf16.mxu0 0
    %254 = vmatpush2.bf16.xpose.msra.mxu0 0
    %255 = vmatprep.subr.bf16.mxu0 0
    %256 = vmatpush2.bf16.xpose.msra.mxu0 0
    %257 = vmatprep.subr.bf16.mxu0 0
    %258 = vmatpush2.bf16.xpose.msra.mxu0 0
    %259 = vmatprep.subr.bf16.mxu0 0
    %260 = vmatpush2.bf16.xpose.msra.mxu0 0
    %261 = vmatprep.subr.bf16.mxu0 0
    %262 = vmatpush2.bf16.xpose.msra.mxu0 0
    %263 = vmatprep.subr.bf16.mxu0 0
    %264 = vmatpush2.bf16.xpose.msra.mxu0 0
    %265 = vmatprep.mubr.bf16.mxu0 0
    %266 = vmatmul.mubr.bf16.gmra.mxu0 %v222
    %v267 = vpop.f32.mrf.mxu0
    %v268 = vadd.f32 %v26, %v267
    %v269 = vpop.f32.mrf.mxu0
    %v270 = vpop.f32.mrf.mxu0
    %v271 = vadd.f32 %v27, %v270
    %v272 = vpop.f32.mrf.mxu0
    %273 = vmatprep.mubr.bf16.mxu0 0
    %274 = vmatmul.mubr.bf16.gmra.mxu0 %v225
    %v275 = vpop.f32.mrf.mxu0
    %v276 = vadd.f32 %v28, %v275
    %v277 = vpop.f32.mrf.mxu0
    %v278 = vpop.f32.mrf.mxu0
    %v279 = vadd.f32 %v29, %v278
    %v280 = vpop.f32.mrf.mxu0
    %281 = vdwg.mxu0
    %v282 = vsel %vm49, %v268, -inf
    %283 = vmax.xlane.f32.xlu0 %v282
    %v284 = vpop.xlane.xlu0 %283
    %v285 = vsel %vm49, %v271, -inf
    %286 = vmax.xlane.f32.xlu0 %v285
    %v287 = vpop.xlane.xlu0 %286
    %v288 = vsel %vm49, %v276, -inf
    %289 = vmax.xlane.f32.xlu0 %v288
    %v290 = vpop.xlane.xlu0 %289
    %v291 = vsel %vm49, %v279, -inf
    %292 = vmax.xlane.f32.xlu0 %v291
    %v293 = vpop.xlane.xlu0 %292
    %v294 = vsub.f32 %v268, %v284
    %v295 = vsub.f32 %v271, %v287
    %v296 = vsub.f32 %v276, %v290
    %v297 = vsub.f32 %v279, %v293
    %v298 = vmul.f32 %v294, 1.442695
    %v299 = vpow.pop %v298
    %v300 = vmul.f32 %v295, 1.442695
    %v301 = vpow.pop %v300
    %v302 = vmul.f32 %v296, 1.442695
    %v303 = vpow.pop %v302
    %v304 = vmul.f32 %v297, 1.442695
    %v305 = vpow.pop %v304
    %v306 = vsel %vm49, %v299, 0.0
    %307 = vadd.xlane.f32.xlu0 %v306
    %v308 = vpop.xlane.xlu0 %307
    %v309 = vsel %vm49, %v301, 0.0
    %310 = vadd.xlane.f32.xlu0 %v309
    %v311 = vpop.xlane.xlu0 %310
    %v312 = vsel %vm49, %v303, 0.0
    %313 = vadd.xlane.f32.xlu0 %v312
    %v314 = vpop.xlane.xlu0 %313
    %v315 = vsel %vm49, %v305, 0.0
    %316 = vadd.xlane.f32.xlu0 %v315
    %v317 = vpop.xlane.xlu0 %316
    %v318 = vrcp.pop %v308
    %v319 = vrcp.pop %v311
    %v320 = vrcp.pop %v314
    %v321 = vrcp.pop %v317
    %v322 = vmul.f32 %v299, %v318
    %v323 = vmul.f32 %v301, %v319
    %v324 = vmul.f32 %v303, %v320
    %v325 = vmul.f32 %v305, %v321
    %v326 = vpack.c.bf16 %v323, %v322
    %v327 = vpack.c.bf16 %v325, %v324
    %330 = vrot.lane.b32.xlu0 %v212, 64
    %v331 = vpop.permute.xlu0 %330
    %332 = vrot.lane.b32.xlu0 %v213, 64
    %v333 = vpop.permute.xlu0 %332
    %v337 = vsel %vm49, %v326, 0
    %v340 = vsel %vm49, %v327, 0
    %342 = vmatprep.subr.bf16.mxu0 0
    %343 = vmatpush1.bf16.msra.mxu0 0
    %344 = vmatprep.subr.bf16.mxu0 0
    %345 = vmatpush1.bf16.msra.mxu0 0
    %346 = vmatprep.subr.bf16.mxu0 0
    %347 = vmatpush1.bf16.msra.mxu0 0
    %348 = vmatprep.subr.bf16.mxu0 0
    %349 = vmatpush1.bf16.msra.mxu0 0
    %350 = vmatprep.subr.bf16.mxu0 0
    %351 = vmatpush1.bf16.msra.mxu0 0
    %352 = vmatprep.subr.bf16.mxu0 0
    %353 = vmatpush1.bf16.msra.mxu0 0
    %354 = vmatprep.subr.bf16.mxu0 0
    %355 = vmatpush1.bf16.msra.mxu0 %v333
    %356 = vmatprep.subr.bf16.mxu0 0
    %357 = vmatpush1.bf16.msra.mxu0 %v331
    %358 = vmatprep.subr.bf16.mxu0 0
    %359 = vmatpush2.bf16.msra.mxu0 0
    %360 = vmatprep.subr.bf16.mxu0 0
    %361 = vmatpush2.bf16.msra.mxu0 0
    %362 = vmatprep.subr.bf16.mxu0 0
    %363 = vmatpush2.bf16.msra.mxu0 0
    %364 = vmatprep.subr.bf16.mxu0 0
    %365 = vmatpush2.bf16.msra.mxu0 0
    %366 = vmatprep.subr.bf16.mxu0 0
    %367 = vmatpush2.bf16.msra.mxu0 0
    %368 = vmatprep.subr.bf16.mxu0 0
    %369 = vmatpush2.bf16.msra.mxu0 0
    %370 = vmatprep.subr.bf16.mxu0 0
    %371 = vmatpush2.bf16.msra.mxu0 0
    %372 = vmatprep.subr.bf16.mxu0 0
    %373 = vmatpush2.bf16.msra.mxu0 0
    %374 = vmatprep.mubr.bf16.mxu0 0
    %375 = vmatmul.mubr.bf16.gmra.mxu0 %v337
    %v376 = vpop.f32.mrf.mxu0
    %v377 = vadd.f32 0.0, %v376
    %v378 = vpop.f32.mrf.mxu0
    %v379 = vpop.f32.mrf.mxu0
    %v380 = vadd.f32 0.0, %v379
    %v381 = vpop.f32.mrf.mxu0
    %382 = vmatprep.mubr.bf16.mxu0 0
    %383 = vmatmul.mubr.bf16.gmra.mxu0 %v340
    %v384 = vpop.f32.mrf.mxu0
    %v385 = vadd.f32 0.0, %v384
    %v386 = vpop.f32.mrf.mxu0
    %v387 = vpop.f32.mrf.mxu0
    %v388 = vadd.f32 0.0, %v387
    %v389 = vpop.f32.mrf.mxu0
    %390 = vdwg.mxu0
    %393 = vrot.lane.b32.xlu0 %v208, 120
    %v394 = vpop.permute.xlu0 %393
    %395 = vrot.lane.b32.xlu0 %v209, 120
    %v396 = vpop.permute.xlu0 %395
    %397 = vrot.lane.b32.xlu0 %v210, 88
    %v398 = vpop.permute.xlu0 %397
    %399 = vrot.lane.b32.xlu0 %v211, 88
    %v400 = vpop.permute.xlu0 %399
    %v402 = vsel %vm220, %v394, 0
    %v405 = vsel %vm220, %v396, 0
    %v408 = vsel %vm220, %v398, 0
    %v411 = vsel %vm220, %v400, 0
    %413 = vmatprep.subr.bf16.mxu0 0
    %414 = vmatpush1.bf16.xpose.msra.mxu0 0
    %415 = vmatprep.subr.bf16.mxu0 0
    %416 = vmatpush1.bf16.xpose.msra.mxu0 0
    %417 = vmatprep.subr.bf16.mxu0 0
    %418 = vmatpush1.bf16.xpose.msra.mxu0 0
    %419 = vmatprep.subr.bf16.mxu0 0
    %420 = vmatpush1.bf16.xpose.msra.mxu0 0
    %421 = vmatprep.subr.bf16.mxu0 0
    %422 = vmatpush1.bf16.xpose.msra.mxu0 0
    %423 = vmatprep.subr.bf16.mxu0 0
    %424 = vmatpush1.bf16.xpose.msra.mxu0 0
    %425 = vmatprep.subr.bf16.mxu0 0
    %426 = vmatpush1.bf16.xpose.msra.mxu0 %v411
    %427 = vmatprep.subr.bf16.mxu0 0
    %428 = vmatpush1.bf16.xpose.msra.mxu0 %v408
    %429 = vmatprep.subr.bf16.mxu0 0
    %430 = vmatpush2.bf16.xpose.msra.mxu0 0
    %431 = vmatprep.subr.bf16.mxu0 0
    %432 = vmatpush2.bf16.xpose.msra.mxu0 0
    %433 = vmatprep.subr.bf16.mxu0 0
    %434 = vmatpush2.bf16.xpose.msra.mxu0 0
    %435 = vmatprep.subr.bf16.mxu0 0
    %436 = vmatpush2.bf16.xpose.msra.mxu0 0
    %437 = vmatprep.subr.bf16.mxu0 0
    %438 = vmatpush2.bf16.xpose.msra.mxu0 0
    %439 = vmatprep.subr.bf16.mxu0 0
    %440 = vmatpush2.bf16.xpose.msra.mxu0 0
    %441 = vmatprep.subr.bf16.mxu0 0
    %442 = vmatpush2.bf16.xpose.msra.mxu0 0
    %443 = vmatprep.subr.bf16.mxu0 0
    %444 = vmatpush2.bf16.xpose.msra.mxu0 0
    %445 = vmatprep.mubr.bf16.mxu0 0
    %446 = vmatmul.mubr.bf16.gmra.mxu0 %v402
    %v447 = vpop.f32.mrf.mxu0
    %v448 = vadd.f32 %v26, %v447
    %v449 = vpop.f32.mrf.mxu0
    %v450 = vpop.f32.mrf.mxu0
    %v451 = vadd.f32 %v27, %v450
    %v452 = vpop.f32.mrf.mxu0
    %453 = vmatprep.mubr.bf16.mxu0 0
    %454 = vmatmul.mubr.bf16.gmra.mxu0 %v405
    %v455 = vpop.f32.mrf.mxu0
    %v456 = vadd.f32 %v28, %v455
    %v457 = vpop.f32.mrf.mxu0
    %v458 = vpop.f32.mrf.mxu0
    %v459 = vadd.f32 %v29, %v458
    %v460 = vpop.f32.mrf.mxu0
    %461 = vdwg.mxu0
    %v462 = vsel %vm49, %v448, -inf
    %463 = vmax.xlane.f32.xlu0 %v462
    %v464 = vpop.xlane.xlu0 %463
    %v465 = vsel %vm49, %v451, -inf
    %466 = vmax.xlane.f32.xlu0 %v465
    %v467 = vpop.xlane.xlu0 %466
    %v468 = vsel %vm49, %v456, -inf
    %469 = vmax.xlane.f32.xlu0 %v468
    %v470 = vpop.xlane.xlu0 %469
    %v471 = vsel %vm49, %v459, -inf
    %472 = vmax.xlane.f32.xlu0 %v471
    %v473 = vpop.xlane.xlu0 %472
    %v474 = vsub.f32 %v448, %v464
    %v475 = vsub.f32 %v451, %v467
    %v476 = vsub.f32 %v456, %v470
    %v477 = vsub.f32 %v459, %v473
    %v478 = vmul.f32 %v474, 1.442695
    %v479 = vpow.pop %v478
    %v480 = vmul.f32 %v475, 1.442695
    %v481 = vpow.pop %v480
    %v482 = vmul.f32 %v476, 1.442695
    %v483 = vpow.pop %v482
    %v484 = vmul.f32 %v477, 1.442695
    %v485 = vpow.pop %v484
    %v486 = vsel %vm49, %v479, 0.0
    %487 = vadd.xlane.f32.xlu0 %v486
    %v488 = vpop.xlane.xlu0 %487
    %v489 = vsel %vm49, %v481, 0.0
    %490 = vadd.xlane.f32.xlu0 %v489
    %v491 = vpop.xlane.xlu0 %490
    %v492 = vsel %vm49, %v483, 0.0
    %493 = vadd.xlane.f32.xlu0 %v492
    %v494 = vpop.xlane.xlu0 %493
    %v495 = vsel %vm49, %v485, 0.0
    %496 = vadd.xlane.f32.xlu0 %v495
    %v497 = vpop.xlane.xlu0 %496
    %v498 = vrcp.pop %v488
    %v499 = vrcp.pop %v491
    %v500 = vrcp.pop %v494
    %v501 = vrcp.pop %v497
    %v502 = vmul.f32 %v479, %v498
    %v503 = vmul.f32 %v481, %v499
    %v504 = vmul.f32 %v483, %v500
    %v505 = vmul.f32 %v485, %v501
    %v506 = vpack.c.bf16 %v503, %v502
    %v507 = vpack.c.bf16 %v505, %v504
    %508 = vrot.lane.b32.xlu0 %v212, 56
    %v509 = vpop.permute.xlu0 %508
    %510 = vrot.lane.b32.xlu0 %v213, 56
    %v511 = vpop.permute.xlu0 %510
    %v515 = vsel %vm49, %v506, 0
    %v518 = vsel %vm49, %v507, 0
    %520 = vmatprep.subr.bf16.mxu0 0
    %521 = vmatpush1.bf16.msra.mxu0 0
    %522 = vmatprep.subr.bf16.mxu0 0
    %523 = vmatpush1.bf16.msra.mxu0 0
    %524 = vmatprep.subr.bf16.mxu0 0
    %525 = vmatpush1.bf16.msra.mxu0 0
    %526 = vmatprep.subr.bf16.mxu0 0
    %527 = vmatpush1.bf16.msra.mxu0 0
    %528 = vmatprep.subr.bf16.mxu0 0
    %529 = vmatpush1.bf16.msra.mxu0 0
    %530 = vmatprep.subr.bf16.mxu0 0
    %531 = vmatpush1.bf16.msra.mxu0 0
    %532 = vmatprep.subr.bf16.mxu0 0
    %533 = vmatpush1.bf16.msra.mxu0 %v511
    %534 = vmatprep.subr.bf16.mxu0 0
    %535 = vmatpush1.bf16.msra.mxu0 %v509
    %536 = vmatprep.subr.bf16.mxu0 0
    %537 = vmatpush2.bf16.msra.mxu0 0
    %538 = vmatprep.subr.bf16.mxu0 0
    %539 = vmatpush2.bf16.msra.mxu0 0
    %540 = vmatprep.subr.bf16.mxu0 0
    %541 = vmatpush2.bf16.msra.mxu0 0
    %542 = vmatprep.subr.bf16.mxu0 0
    %543 = vmatpush2.bf16.msra.mxu0 0
    %544 = vmatprep.subr.bf16.mxu0 0
    %545 = vmatpush2.bf16.msra.mxu0 0
    %546 = vmatprep.subr.bf16.mxu0 0
    %547 = vmatpush2.bf16.msra.mxu0 0
    %548 = vmatprep.subr.bf16.mxu0 0
    %549 = vmatpush2.bf16.msra.mxu0 0
    %550 = vmatprep.subr.bf16.mxu0 0
    %551 = vmatpush2.bf16.msra.mxu0 0
    %552 = vmatprep.mubr.bf16.mxu0 0
    %553 = vmatmul.mubr.bf16.gmra.mxu0 %v515
    %v554 = vpop.f32.mrf.mxu0
    %v555 = vadd.f32 0.0, %v554
    %v556 = vpop.f32.mrf.mxu0
    %v557 = vpop.f32.mrf.mxu0
    %v558 = vadd.f32 0.0, %v557
    %v559 = vpop.f32.mrf.mxu0
    %560 = vmatprep.mubr.bf16.mxu0 0
    %561 = vmatmul.mubr.bf16.gmra.mxu0 %v518
    %v562 = vpop.f32.mrf.mxu0
    %v563 = vadd.f32 0.0, %v562
    %v564 = vpop.f32.mrf.mxu0
    %v565 = vpop.f32.mrf.mxu0
    %v566 = vadd.f32 0.0, %v565
    %v567 = vpop.f32.mrf.mxu0
    %568 = vdwg.mxu0
    %569 = vrot.lane.b32.xlu0 %v208, 112
    %v570 = vpop.permute.xlu0 %569
    %571 = vrot.lane.b32.xlu0 %v209, 112
    %v572 = vpop.permute.xlu0 %571
    %573 = vrot.lane.b32.xlu0 %v210, 80
    %v574 = vpop.permute.xlu0 %573
    %575 = vrot.lane.b32.xlu0 %v211, 80
    %v576 = vpop.permute.xlu0 %575
    %v578 = vsel %vm220, %v570, 0
    %v581 = vsel %vm220, %v572, 0
    %v584 = vsel %vm220, %v574, 0
    %v587 = vsel %vm220, %v576, 0
    %589 = vmatprep.subr.bf16.mxu0 0
    %590 = vmatpush1.bf16.xpose.msra.mxu0 0
    %591 = vmatprep.subr.bf16.mxu0 0
    %592 = vmatpush1.bf16.xpose.msra.mxu0 0
    %593 = vmatprep.subr.bf16.mxu0 0
    %594 = vmatpush1.bf16.xpose.msra.mxu0 0
    %595 = vmatprep.subr.bf16.mxu0 0
    %596 = vmatpush1.bf16.xpose.msra.mxu0 0
    %597 = vmatprep.subr.bf16.mxu0 0
    %598 = vmatpush1.bf16.xpose.msra.mxu0 0
    %599 = vmatprep.subr.bf16.mxu0 0
    %600 = vmatpush1.bf16.xpose.msra.mxu0 0
    %601 = vmatprep.subr.bf16.mxu0 0
    %602 = vmatpush1.bf16.xpose.msra.mxu0 %v587
    %603 = vmatprep.subr.bf16.mxu0 0
    %604 = vmatpush1.bf16.xpose.msra.mxu0 %v584
    %605 = vmatprep.subr.bf16.mxu0 0
    %606 = vmatpush2.bf16.xpose.msra.mxu0 0
    %607 = vmatprep.subr.bf16.mxu0 0
    %608 = vmatpush2.bf16.xpose.msra.mxu0 0
    %609 = vmatprep.subr.bf16.mxu0 0
    %610 = vmatpush2.bf16.xpose.msra.mxu0 0
    %611 = vmatprep.subr.bf16.mxu0 0
    %612 = vmatpush2.bf16.xpose.msra.mxu0 0
    %613 = vmatprep.subr.bf16.mxu0 0
    %614 = vmatpush2.bf16.xpose.msra.mxu0 0
    %615 = vmatprep.subr.bf16.mxu0 0
    %616 = vmatpush2.bf16.xpose.msra.mxu0 0
    %617 = vmatprep.subr.bf16.mxu0 0
    %618 = vmatpush2.bf16.xpose.msra.mxu0 0
    %619 = vmatprep.subr.bf16.mxu0 0
    %620 = vmatpush2.bf16.xpose.msra.mxu0 0
    %621 = vmatprep.mubr.bf16.mxu0 0
    %622 = vmatmul.mubr.bf16.gmra.mxu0 %v578
    %v623 = vpop.f32.mrf.mxu0
    %v624 = vadd.f32 %v26, %v623
    %v625 = vpop.f32.mrf.mxu0
    %v626 = vpop.f32.mrf.mxu0
    %v627 = vadd.f32 %v27, %v626
    %v628 = vpop.f32.mrf.mxu0
    %629 = vmatprep.mubr.bf16.mxu0 0
    %630 = vmatmul.mubr.bf16.gmra.mxu0 %v581
    %v631 = vpop.f32.mrf.mxu0
    %v632 = vadd.f32 %v28, %v631
    %v633 = vpop.f32.mrf.mxu0
    %v634 = vpop.f32.mrf.mxu0
    %v635 = vadd.f32 %v29, %v634
    %v636 = vpop.f32.mrf.mxu0
    %637 = vdwg.mxu0
    %v638 = vsel %vm49, %v624, -inf
    %639 = vmax.xlane.f32.xlu0 %v638
    %v640 = vpop.xlane.xlu0 %639
    %v641 = vsel %vm49, %v627, -inf
    %642 = vmax.xlane.f32.xlu0 %v641
    %v643 = vpop.xlane.xlu0 %642
    %v644 = vsel %vm49, %v632, -inf
    %645 = vmax.xlane.f32.xlu0 %v644
    %v646 = vpop.xlane.xlu0 %645
    %v647 = vsel %vm49, %v635, -inf
    %648 = vmax.xlane.f32.xlu0 %v647
    %v649 = vpop.xlane.xlu0 %648
    %v650 = vsub.f32 %v624, %v640
    %v651 = vsub.f32 %v627, %v643
    %v652 = vsub.f32 %v632, %v646
    %v653 = vsub.f32 %v635, %v649
    %v654 = vmul.f32 %v650, 1.442695
    %v655 = vpow.pop %v654
    %v656 = vmul.f32 %v651, 1.442695
    %v657 = vpow.pop %v656
    %v658 = vmul.f32 %v652, 1.442695
    %v659 = vpow.pop %v658
    %v660 = vmul.f32 %v653, 1.442695
    %v661 = vpow.pop %v660
    %v662 = vsel %vm49, %v655, 0.0
    %663 = vadd.xlane.f32.xlu0 %v662
    %v664 = vpop.xlane.xlu0 %663
    %v665 = vsel %vm49, %v657, 0.0
    %666 = vadd.xlane.f32.xlu0 %v665
    %v667 = vpop.xlane.xlu0 %666
    %v668 = vsel %vm49, %v659, 0.0
    %669 = vadd.xlane.f32.xlu0 %v668
    %v670 = vpop.xlane.xlu0 %669
    %v671 = vsel %vm49, %v661, 0.0
    %672 = vadd.xlane.f32.xlu0 %v671
    %v673 = vpop.xlane.xlu0 %672
    %v674 = vrcp.pop %v664
    %v675 = vrcp.pop %v667
    %v676 = vrcp.pop %v670
    %v677 = vrcp.pop %v673
    %v678 = vmul.f32 %v655, %v674
    %v679 = vmul.f32 %v657, %v675
    %v680 = vmul.f32 %v659, %v676
    %v681 = vmul.f32 %v661, %v677
    %v682 = vpack.c.bf16 %v679, %v678
    %v683 = vpack.c.bf16 %v681, %v680
    %684 = vrot.lane.b32.xlu0 %v212, 48
    %v685 = vpop.permute.xlu0 %684
    %686 = vrot.lane.b32.xlu0 %v213, 48
    %v687 = vpop.permute.xlu0 %686
    %v691 = vsel %vm49, %v682, 0
    %v694 = vsel %vm49, %v683, 0
    %696 = vmatprep.subr.bf16.mxu0 0
    %697 = vmatpush1.bf16.msra.mxu0 0
    %698 = vmatprep.subr.bf16.mxu0 0
    %699 = vmatpush1.bf16.msra.mxu0 0
    %700 = vmatprep.subr.bf16.mxu0 0
    %701 = vmatpush1.bf16.msra.mxu0 0
    %702 = vmatprep.subr.bf16.mxu0 0
    %703 = vmatpush1.bf16.msra.mxu0 0
    %704 = vmatprep.subr.bf16.mxu0 0
    %705 = vmatpush1.bf16.msra.mxu0 0
    %706 = vmatprep.subr.bf16.mxu0 0
    %707 = vmatpush1.bf16.msra.mxu0 0
    %708 = vmatprep.subr.bf16.mxu0 0
    %709 = vmatpush1.bf16.msra.mxu0 %v687
    %710 = vmatprep.subr.bf16.mxu0 0
    %711 = vmatpush1.bf16.msra.mxu0 %v685
    %712 = vmatprep.subr.bf16.mxu0 0
    %713 = vmatpush2.bf16.msra.mxu0 0
    %714 = vmatprep.subr.bf16.mxu0 0
    %715 = vmatpush2.bf16.msra.mxu0 0
    %716 = vmatprep.subr.bf16.mxu0 0
    %717 = vmatpush2.bf16.msra.mxu0 0
    %718 = vmatprep.subr.bf16.mxu0 0
    %719 = vmatpush2.bf16.msra.mxu0 0
    %720 = vmatprep.subr.bf16.mxu0 0
    %721 = vmatpush2.bf16.msra.mxu0 0
    %722 = vmatprep.subr.bf16.mxu0 0
    %723 = vmatpush2.bf16.msra.mxu0 0
    %724 = vmatprep.subr.bf16.mxu0 0
    %725 = vmatpush2.bf16.msra.mxu0 0
    %726 = vmatprep.subr.bf16.mxu0 0
    %727 = vmatpush2.bf16.msra.mxu0 0
    %728 = vmatprep.mubr.bf16.mxu0 0
    %729 = vmatmul.mubr.bf16.gmra.mxu0 %v691
    %v730 = vpop.f32.mrf.mxu0
    %v731 = vadd.f32 0.0, %v730
    %v732 = vpop.f32.mrf.mxu0
    %v733 = vpop.f32.mrf.mxu0
    %v734 = vadd.f32 0.0, %v733
    %v735 = vpop.f32.mrf.mxu0
    %736 = vmatprep.mubr.bf16.mxu0 0
    %737 = vmatmul.mubr.bf16.gmra.mxu0 %v694
    %v738 = vpop.f32.mrf.mxu0
    %v739 = vadd.f32 0.0, %v738
    %v740 = vpop.f32.mrf.mxu0
    %v741 = vpop.f32.mrf.mxu0
    %v742 = vadd.f32 0.0, %v741
    %v743 = vpop.f32.mrf.mxu0
    %744 = vdwg.mxu0
    %745 = vrot.lane.b32.xlu0 %v208, 104
    %v746 = vpop.permute.xlu0 %745
    %747 = vrot.lane.b32.xlu0 %v209, 104
    %v748 = vpop.permute.xlu0 %747
    %749 = vrot.lane.b32.xlu0 %v210, 72
    %v750 = vpop.permute.xlu0 %749
    %751 = vrot.lane.b32.xlu0 %v211, 72
    %v752 = vpop.permute.xlu0 %751
    %v754 = vsel %vm220, %v746, 0
    %v757 = vsel %vm220, %v748, 0
    %v760 = vsel %vm220, %v750, 0
    %v763 = vsel %vm220, %v752, 0
    %765 = vmatprep.subr.bf16.mxu0 0
    %766 = vmatpush1.bf16.xpose.msra.mxu0 0
    %767 = vmatprep.subr.bf16.mxu0 0
    %768 = vmatpush1.bf16.xpose.msra.mxu0 0
    %769 = vmatprep.subr.bf16.mxu0 0
    %770 = vmatpush1.bf16.xpose.msra.mxu0 0
    %771 = vmatprep.subr.bf16.mxu0 0
    %772 = vmatpush1.bf16.xpose.msra.mxu0 0
    %773 = vmatprep.subr.bf16.mxu0 0
    %774 = vmatpush1.bf16.xpose.msra.mxu0 0
    %775 = vmatprep.subr.bf16.mxu0 0
    %776 = vmatpush1.bf16.xpose.msra.mxu0 0
    %777 = vmatprep.subr.bf16.mxu0 0
    %778 = vmatpush1.bf16.xpose.msra.mxu0 %v763
    %779 = vmatprep.subr.bf16.mxu0 0
    %780 = vmatpush1.bf16.xpose.msra.mxu0 %v760
    %781 = vmatprep.subr.bf16.mxu0 0
    %782 = vmatpush2.bf16.xpose.msra.mxu0 0
    %783 = vmatprep.subr.bf16.mxu0 0
    %784 = vmatpush2.bf16.xpose.msra.mxu0 0
    %785 = vmatprep.subr.bf16.mxu0 0
    %786 = vmatpush2.bf16.xpose.msra.mxu0 0
    %787 = vmatprep.subr.bf16.mxu0 0
    %788 = vmatpush2.bf16.xpose.msra.mxu0 0
    %789 = vmatprep.subr.bf16.mxu0 0
    %790 = vmatpush2.bf16.xpose.msra.mxu0 0
    %791 = vmatprep.subr.bf16.mxu0 0
    %792 = vmatpush2.bf16.xpose.msra.mxu0 0
    %793 = vmatprep.subr.bf16.mxu0 0
    %794 = vmatpush2.bf16.xpose.msra.mxu0 0
    %795 = vmatprep.subr.bf16.mxu0 0
    %796 = vmatpush2.bf16.xpose.msra.mxu0 0
    %797 = vmatprep.mubr.bf16.mxu0 0
    %798 = vmatmul.mubr.bf16.gmra.mxu0 %v754
    %v799 = vpop.f32.mrf.mxu0
    %v800 = vadd.f32 %v26, %v799
    %v801 = vpop.f32.mrf.mxu0
    %v802 = vpop.f32.mrf.mxu0
    %v803 = vadd.f32 %v27, %v802
    %v804 = vpop.f32.mrf.mxu0
    %805 = vmatprep.mubr.bf16.mxu0 0
    %806 = vmatmul.mubr.bf16.gmra.mxu0 %v757
    %v807 = vpop.f32.mrf.mxu0
    %v808 = vadd.f32 %v28, %v807
    %v809 = vpop.f32.mrf.mxu0
    %v810 = vpop.f32.mrf.mxu0
    %v811 = vadd.f32 %v29, %v810
    %v812 = vpop.f32.mrf.mxu0
    %813 = vdwg.mxu0
    %v814 = vsel %vm49, %v800, -inf
    %815 = vmax.xlane.f32.xlu0 %v814
    %v816 = vpop.xlane.xlu0 %815
    %v817 = vsel %vm49, %v803, -inf
    %818 = vmax.xlane.f32.xlu0 %v817
    %v819 = vpop.xlane.xlu0 %818
    %v820 = vsel %vm49, %v808, -inf
    %821 = vmax.xlane.f32.xlu0 %v820
    %v822 = vpop.xlane.xlu0 %821
    %v823 = vsel %vm49, %v811, -inf
    %824 = vmax.xlane.f32.xlu0 %v823
    %v825 = vpop.xlane.xlu0 %824
    %v826 = vsub.f32 %v800, %v816
    %v827 = vsub.f32 %v803, %v819
    %v828 = vsub.f32 %v808, %v822
    %v829 = vsub.f32 %v811, %v825
    %v830 = vmul.f32 %v826, 1.442695
    %v831 = vpow.pop %v830
    %v832 = vmul.f32 %v827, 1.442695
    %v833 = vpow.pop %v832
    %v834 = vmul.f32 %v828, 1.442695
    %v835 = vpow.pop %v834
    %v836 = vmul.f32 %v829, 1.442695
    %v837 = vpow.pop %v836
    %v838 = vsel %vm49, %v831, 0.0
    %839 = vadd.xlane.f32.xlu0 %v838
    %v840 = vpop.xlane.xlu0 %839
    %v841 = vsel %vm49, %v833, 0.0
    %842 = vadd.xlane.f32.xlu0 %v841
    %v843 = vpop.xlane.xlu0 %842
    %v844 = vsel %vm49, %v835, 0.0
    %845 = vadd.xlane.f32.xlu0 %v844
    %v846 = vpop.xlane.xlu0 %845
    %v847 = vsel %vm49, %v837, 0.0
    %848 = vadd.xlane.f32.xlu0 %v847
    %v849 = vpop.xlane.xlu0 %848
    %v850 = vrcp.pop %v840
    %v851 = vrcp.pop %v843
    %v852 = vrcp.pop %v846
    %v853 = vrcp.pop %v849
    %v854 = vmul.f32 %v831, %v850
    %v855 = vmul.f32 %v833, %v851
    %v856 = vmul.f32 %v835, %v852
    %v857 = vmul.f32 %v837, %v853
    %v858 = vpack.c.bf16 %v855, %v854
    %v859 = vpack.c.bf16 %v857, %v856
    %860 = vrot.lane.b32.xlu0 %v212, 40
    %v861 = vpop.permute.xlu0 %860
    %862 = vrot.lane.b32.xlu0 %v213, 40
    %v863 = vpop.permute.xlu0 %862
    %v867 = vsel %vm49, %v858, 0
    %v870 = vsel %vm49, %v859, 0
    %872 = vmatprep.subr.bf16.mxu0 0
    %873 = vmatpush1.bf16.msra.mxu0 0
    %874 = vmatprep.subr.bf16.mxu0 0
    %875 = vmatpush1.bf16.msra.mxu0 0
    %876 = vmatprep.subr.bf16.mxu0 0
    %877 = vmatpush1.bf16.msra.mxu0 0
    %878 = vmatprep.subr.bf16.mxu0 0
    %879 = vmatpush1.bf16.msra.mxu0 0
    %880 = vmatprep.subr.bf16.mxu0 0
    %881 = vmatpush1.bf16.msra.mxu0 0
    %882 = vmatprep.subr.bf16.mxu0 0
    %883 = vmatpush1.bf16.msra.mxu0 0
    %884 = vmatprep.subr.bf16.mxu0 0
    %885 = vmatpush1.bf16.msra.mxu0 %v863
    %886 = vmatprep.subr.bf16.mxu0 0
    %887 = vmatpush1.bf16.msra.mxu0 %v861
    %888 = vmatprep.subr.bf16.mxu0 0
    %889 = vmatpush2.bf16.msra.mxu0 0
    %890 = vmatprep.subr.bf16.mxu0 0
    %891 = vmatpush2.bf16.msra.mxu0 0
    %892 = vmatprep.subr.bf16.mxu0 0
    %893 = vmatpush2.bf16.msra.mxu0 0
    %894 = vmatprep.subr.bf16.mxu0 0
    %895 = vmatpush2.bf16.msra.mxu0 0
    %896 = vmatprep.subr.bf16.mxu0 0
    %897 = vmatpush2.bf16.msra.mxu0 0
    %898 = vmatprep.subr.bf16.mxu0 0
    %899 = vmatpush2.bf16.msra.mxu0 0
    %900 = vmatprep.subr.bf16.mxu0 0
    %901 = vmatpush2.bf16.msra.mxu0 0
    %902 = vmatprep.subr.bf16.mxu0 0
    %903 = vmatpush2.bf16.msra.mxu0 0
    %904 = vmatprep.mubr.bf16.mxu0 0
    %905 = vmatmul.mubr.bf16.gmra.mxu0 %v867
    %v906 = vpop.f32.mrf.mxu0
    %v907 = vadd.f32 0.0, %v906
    %v908 = vpop.f32.mrf.mxu0
    %v909 = vpop.f32.mrf.mxu0
    %v910 = vadd.f32 0.0, %v909
    %v911 = vpop.f32.mrf.mxu0
    %912 = vmatprep.mubr.bf16.mxu0 0
    %913 = vmatmul.mubr.bf16.gmra.mxu0 %v870
    %v914 = vpop.f32.mrf.mxu0
    %v915 = vadd.f32 0.0, %v914
    %v916 = vpop.f32.mrf.mxu0
    %v917 = vpop.f32.mrf.mxu0
    %v918 = vadd.f32 0.0, %v917
    %v919 = vpop.f32.mrf.mxu0
    %920 = vdwg.mxu0
    %925 = vrot.lane.b32.xlu0 %v555, 8
    %v926 = vpop.permute.xlu0 %925
    %927 = vrot.lane.b32.xlu0 %v558, 8
    %v928 = vpop.permute.xlu0 %927
    %929 = vrot.lane.b32.xlu0 %v563, 8
    %v930 = vpop.permute.xlu0 %929
    %931 = vrot.lane.b32.xlu0 %v566, 8
    %v932 = vpop.permute.xlu0 %931
    %941 = vrot.lane.b32.xlu0 %v731, 16
    %v942 = vpop.permute.xlu0 %941
    %943 = vrot.lane.b32.xlu0 %v734, 16
    %v944 = vpop.permute.xlu0 %943
    %945 = vrot.lane.b32.xlu0 %v739, 16
    %v946 = vpop.permute.xlu0 %945
    %947 = vrot.lane.b32.xlu0 %v742, 16
    %v948 = vpop.permute.xlu0 %947
    %957 = vrot.lane.b32.xlu0 %v907, 24
    %v958 = vpop.permute.xlu0 %957
    %959 = vrot.lane.b32.xlu0 %v910, 24
    %v960 = vpop.permute.xlu0 %959
    %961 = vrot.lane.b32.xlu0 %v915, 24
    %v962 = vpop.permute.xlu0 %961
    %963 = vrot.lane.b32.xlu0 %v918, 24
    %v964 = vpop.permute.xlu0 %963
    %v969 = vsel %vm220, %v377, %v926
    %v970 = vsel %vm220, %v380, %v928
    %v971 = vsel %vm220, %v385, %v930
    %v972 = vsel %vm220, %v388, %v932
    %vm973 = vcmask 130048
    %v974 = vsel %vm973, %v969, %v942
    %v975 = vsel %vm973, %v970, %v944
    %v976 = vsel %vm973, %v971, %v946
    %v977 = vsel %vm973, %v972, %v948
    %vm978 = vcmask 195584
    %v979 = vsel %vm978, %v974, %v958
    %v980 = vsel %vm978, %v975, %v960
    %v981 = vsel %vm978, %v976, %v962
    %v982 = vsel %vm978, %v977, %v964
    %v983 = vpack.c.bf16 %v980, %v979
    %v984 = vld [vmem:[%s3] sm:$0xf]
    %v985 = vld [vmem:[%s3 + $0x4] sm:$0xf]
    %v986 = vld [vmem:[%s3 + $0x8] sm:$0xf]
    %v987 = vld [vmem:[%s3 + $0xc] sm:$0xf]
    %v988 = vlaneseq
    %v989 = vshrl.u32 %v988, 7
    %v990 = vsub.s32 6, %v989
    %v991 = vrot.slane %v30, %v990
    %v996 = vunpack.c.l.b16 %v984
    %v997 = vunpack.c.l.b16 %v985
    %v998 = vunpack.c.l.b16 %v986
    %v999 = vunpack.c.l.b16 %v987
    %v1000 = vpack.c.b16 %v997, %v996
    %v1001 = vpack.c.b16 %v999, %v998
    %v1005 = vsel %vm49, %v983, 0
    %1007 = vmatprep.subr.bf16.mxu0 0
    %1008 = vmatpush1.bf16.msra.mxu0 0
    %1009 = vmatprep.subr.bf16.mxu0 0
    %1010 = vmatpush1.bf16.msra.mxu0 0
    %1011 = vmatprep.subr.bf16.mxu0 0
    %1012 = vmatpush1.bf16.msra.mxu0 0
    %1013 = vmatprep.subr.bf16.mxu0 0
    %1014 = vmatpush1.bf16.msra.mxu0 0
    %1015 = vmatprep.subr.bf16.mxu0 0
    %1016 = vmatpush1.bf16.msra.mxu0 0
    %1017 = vmatprep.subr.bf16.mxu0 0
    %1018 = vmatpush1.bf16.msra.mxu0 0
    %1019 = vmatprep.subr.bf16.mxu0 0
    %1020 = vmatpush1.bf16.msra.mxu0 %v1001
    %1021 = vmatprep.subr.bf16.mxu0 0
    %1022 = vmatpush1.bf16.msra.mxu0 %v1000
    %1023 = vmatprep.subr.bf16.mxu0 0
    %1024 = vmatpush2.bf16.msra.mxu0 0
    %1025 = vmatprep.subr.bf16.mxu0 0
    %1026 = vmatpush2.bf16.msra.mxu0 0
    %1027 = vmatprep.subr.bf16.mxu0 0
    %1028 = vmatpush2.bf16.msra.mxu0 0
    %1029 = vmatprep.subr.bf16.mxu0 0
    %1030 = vmatpush2.bf16.msra.mxu0 0
    %1031 = vmatprep.subr.bf16.mxu0 0
    %1032 = vmatpush2.bf16.msra.mxu0 0
    %1033 = vmatprep.subr.bf16.mxu0 0
    %1034 = vmatpush2.bf16.msra.mxu0 0
    %1035 = vmatprep.subr.bf16.mxu0 0
    %1036 = vmatpush2.bf16.msra.mxu0 0
    %1037 = vmatprep.subr.bf16.mxu0 0
    %1038 = vmatpush2.bf16.msra.mxu0 0
    %1039 = vmatprep.mubr.bf16.mxu0 0
    %1040 = vmatmul.mubr.bf16.gmra.mxu0 %v1005
    %v1041 = vpop.f32.mrf.mxu0
    %v1042 = vadd.f32 %v991, %v1041
    %v1043 = vpop.f32.mrf.mxu0
    %v1044 = vpop.f32.mrf.mxu0
    %v1045 = vadd.f32 %v991, %v1044
    %v1046 = vpop.f32.mrf.mxu0
    %1047 = vdwg.mxu0
    %v1048 = vpack.c.bf16 %v982, %v981
    %s1049 = scalar_lea.vmem %s3, 16
    %v1050 = vld [vmem:[%s1049] sm:$0xf]
    %v1051 = vld [vmem:[%s1049 + $0x4] sm:$0xf]
    %v1052 = vld [vmem:[%s1049 + $0x8] sm:$0xf]
    %v1053 = vld [vmem:[%s1049 + $0xc] sm:$0xf]
    %v1054 = vlaneseq
    %v1055 = vshrl.u32 %v1054, 7
    %v1056 = vsub.s32 7, %v1055
    %v1057 = vrot.slane %v30, %v1056
    %v1062 = vunpack.c.l.b16 %v1050
    %v1063 = vunpack.c.l.b16 %v1051
    %v1064 = vunpack.c.l.b16 %v1052
    %v1065 = vunpack.c.l.b16 %v1053
    %v1066 = vpack.c.b16 %v1063, %v1062
    %v1067 = vpack.c.b16 %v1065, %v1064
    %v1071 = vsel %vm49, %v1048, 0
    %1073 = vmatprep.subr.bf16.mxu0 0
    %1074 = vmatpush1.bf16.msra.mxu0 0
    %1075 = vmatprep.subr.bf16.mxu0 0
    %1076 = vmatpush1.bf16.msra.mxu0 0
    %1077 = vmatprep.subr.bf16.mxu0 0
    %1078 = vmatpush1.bf16.msra.mxu0 0
    %1079 = vmatprep.subr.bf16.mxu0 0
    %1080 = vmatpush1.bf16.msra.mxu0 0
    %1081 = vmatprep.subr.bf16.mxu0 0
    %1082 = vmatpush1.bf16.msra.mxu0 0
    %1083 = vmatprep.subr.bf16.mxu0 0
    %1084 = vmatpush1.bf16.msra.mxu0 0
    %1085 = vmatprep.subr.bf16.mxu0 0
    %1086 = vmatpush1.bf16.msra.mxu0 %v1067
    %1087 = vmatprep.subr.bf16.mxu0 0
    %1088 = vmatpush1.bf16.msra.mxu0 %v1066
    %1089 = vmatprep.subr.bf16.mxu0 0
    %1090 = vmatpush2.bf16.msra.mxu0 0
    %1091 = vmatprep.subr.bf16.mxu0 0
    %1092 = vmatpush2.bf16.msra.mxu0 0
    %1093 = vmatprep.subr.bf16.mxu0 0
    %1094 = vmatpush2.bf16.msra.mxu0 0
    %1095 = vmatprep.subr.bf16.mxu0 0
    %1096 = vmatpush2.bf16.msra.mxu0 0
    %1097 = vmatprep.subr.bf16.mxu0 0
    %1098 = vmatpush2.bf16.msra.mxu0 0
    %1099 = vmatprep.subr.bf16.mxu0 0
    %1100 = vmatpush2.bf16.msra.mxu0 0
    %1101 = vmatprep.subr.bf16.mxu0 0
    %1102 = vmatpush2.bf16.msra.mxu0 0
    %1103 = vmatprep.subr.bf16.mxu0 0
    %1104 = vmatpush2.bf16.msra.mxu0 0
    %1105 = vmatprep.mubr.bf16.mxu0 0
    %1106 = vmatmul.mubr.bf16.gmra.mxu0 %v1071
    %v1107 = vpop.f32.mrf.mxu0
    %v1108 = vadd.f32 %v1057, %v1107
    %v1109 = vpop.f32.mrf.mxu0
    %v1110 = vpop.f32.mrf.mxu0
    %v1111 = vadd.f32 %v1057, %v1110
    %v1112 = vpop.f32.mrf.mxu0
    %1113 = vdwg.mxu0
    %v1114 = vsel %vm49, %v1108, 0.0
    %1115 = vadd.xlane.f32.xlu0 %v1114
    %v1116 = vpop.xlane.xlu0 %1115
    %v1117 = vsel %vm49, %v1111, 0.0
    %1118 = vadd.xlane.f32.xlu0 %v1117
    %v1119 = vpop.xlane.xlu0 %1118
    %v1120 = vrcp.pop 32.0
    %v1121 = vmul.f32 %v1116, %v1120
    %v1122 = vmul.f32 %v1119, %v1120
    %v1123 = vsub.f32 %v1108, %v1121
    %v1124 = vsub.f32 %v1111, %v1122
    %v1125 = vmul.f32 %v1123, %v1123
    %v1126 = vmul.f32 %v1124, %v1124
    %v1127 = vsel %vm49, %v1125, 0.0
    %1128 = vadd.xlane.f32.xlu0 %v1127
    %v1129 = vpop.xlane.xlu0 %1128
    %v1130 = vsel %vm49, %v1126, 0.0
    %1131 = vadd.xlane.f32.xlu0 %v1130
    %v1132 = vpop.xlane.xlu0 %1131
    %v1133 = vmul.f32 %v1129, %v1120
    %v1134 = vmul.f32 %v1132, %v1120
    %v1135 = vadd.f32 %v1133, 1e-05
    %v1136 = vadd.f32 %v1134, 1e-05
    %v1137 = vrsqrt.pop %v1135
    %v1138 = vrsqrt.pop %v1136
    %v1139 = vmul.f32 %v1123, %v1137
    %v1140 = vmul.f32 %v1124, %v1138
    %v1141 = vlaneseq
    %v1142 = vshrl.u32 %v1141, 7
    %v1143 = vsub.s32 0, %v1142
    %v1144 = vrot.slane %v31, %v1143
    %v1145 = vmul.f32 %v1139, %v1144
    %v1146 = vmul.f32 %v1140, %v1144
    %v1147 = vlaneseq
    %v1148 = vshrl.u32 %v1147, 7
    %v1149 = vsub.s32 1, %v1148
    %v1150 = vrot.slane %v31, %v1149
    %v1151 = vadd.f32 %v1145, %v1150
    %v1152 = vadd.f32 %v1146, %v1150
    %v1153 = vadd.f32 %v22, %v1151
    %v1154 = vadd.f32 %v23, %v1152
    %v1155 = vsel %vm49, %v1042, 0.0
    %1156 = vadd.xlane.f32.xlu0 %v1155
    %v1157 = vpop.xlane.xlu0 %1156
    %v1158 = vsel %vm49, %v1045, 0.0
    %1159 = vadd.xlane.f32.xlu0 %v1158
    %v1160 = vpop.xlane.xlu0 %1159
    %v1161 = vmul.f32 %v1157, %v1120
    %v1162 = vmul.f32 %v1160, %v1120
    %v1163 = vsub.f32 %v1042, %v1161
    %v1164 = vsub.f32 %v1045, %v1162
    %v1165 = vmul.f32 %v1163, %v1163
    %v1166 = vmul.f32 %v1164, %v1164
    %v1167 = vsel %vm49, %v1165, 0.0
    %1168 = vadd.xlane.f32.xlu0 %v1167
    %v1169 = vpop.xlane.xlu0 %1168
    %v1170 = vsel %vm49, %v1166, 0.0
    %1171 = vadd.xlane.f32.xlu0 %v1170
    %v1172 = vpop.xlane.xlu0 %1171
    %v1173 = vmul.f32 %v1169, %v1120
    %v1174 = vmul.f32 %v1172, %v1120
    %v1175 = vadd.f32 %v1173, 1e-05
    %v1176 = vadd.f32 %v1174, 1e-05
    %v1177 = vrsqrt.pop %v1175
    %v1178 = vrsqrt.pop %v1176
    %v1179 = vmul.f32 %v1163, %v1177
    %v1180 = vmul.f32 %v1164, %v1178
    %v1181 = vlaneseq
    %v1182 = vshrl.u32 %v1181, 7
    %v1183 = vsub.s32 2, %v1182
    %v1184 = vrot.slane %v31, %v1183
    %v1185 = vmul.f32 %v1179, %v1184
    %v1186 = vmul.f32 %v1180, %v1184
    %v1187 = vlaneseq
    %v1188 = vshrl.u32 %v1187, 7
    %v1189 = vsub.s32 3, %v1188
    %v1190 = vrot.slane %v31, %v1189
    %v1191 = vadd.f32 %v1185, %v1190
    %v1192 = vadd.f32 %v1186, %v1190
    %v1193 = vadd.f32 %v24, %v1191
    %v1194 = vadd.f32 %v25, %v1192
    %s1195 = scalar_lea.vmem %s4, 16
    %v1196 = vld [vmem:[%s1195] sm:$0xff]
    %v1197 = vld [vmem:[%s1195 + $0x8] sm:$0xf]
    %v1198 = vpack.c.bf16 %v1154, %v1153
    %s1199 = scalar_lea.vmem %s2, 32
    %v1200 = vld [vmem:[%s1199] sm:$0xf]
    %v1201 = vld [vmem:[%s1199 + $0x4] sm:$0xf]
    %v1202 = vld [vmem:[%s1199 + $0x8] sm:$0xf]
    %v1203 = vld [vmem:[%s1199 + $0xc] sm:$0xf]
    %v1208 = vunpack.c.l.b16 %v1200
    %v1209 = vunpack.c.l.b16 %v1201
    %v1210 = vunpack.c.l.b16 %v1202
    %v1211 = vunpack.c.l.b16 %v1203
    %v1212 = vpack.c.b16 %v1209, %v1208
    %v1213 = vpack.c.b16 %v1211, %v1210
    %v1217 = vsel %vm49, %v1198, 0
    %1219 = vmatprep.subr.bf16.mxu0 0
    %1220 = vmatpush1.bf16.msra.mxu0 0
    %1221 = vmatprep.subr.bf16.mxu0 0
    %1222 = vmatpush1.bf16.msra.mxu0 0
    %1223 = vmatprep.subr.bf16.mxu0 0
    %1224 = vmatpush1.bf16.msra.mxu0 0
    %1225 = vmatprep.subr.bf16.mxu0 0
    %1226 = vmatpush1.bf16.msra.mxu0 0
    %1227 = vmatprep.subr.bf16.mxu0 0
    %1228 = vmatpush1.bf16.msra.mxu0 0
    %1229 = vmatprep.subr.bf16.mxu0 0
    %1230 = vmatpush1.bf16.msra.mxu0 0
    %1231 = vmatprep.subr.bf16.mxu0 0
    %1232 = vmatpush1.bf16.msra.mxu0 %v1213
    %1233 = vmatprep.subr.bf16.mxu0 0
    %1234 = vmatpush1.bf16.msra.mxu0 %v1212
    %1235 = vmatprep.subr.bf16.mxu0 0
    %1236 = vmatpush2.bf16.msra.mxu0 0
    %1237 = vmatprep.subr.bf16.mxu0 0
    %1238 = vmatpush2.bf16.msra.mxu0 0
    %1239 = vmatprep.subr.bf16.mxu0 0
    %1240 = vmatpush2.bf16.msra.mxu0 0
    %1241 = vmatprep.subr.bf16.mxu0 0
    %1242 = vmatpush2.bf16.msra.mxu0 0
    %1243 = vmatprep.subr.bf16.mxu0 0
    %1244 = vmatpush2.bf16.msra.mxu0 0
    %1245 = vmatprep.subr.bf16.mxu0 0
    %1246 = vmatpush2.bf16.msra.mxu0 0
    %1247 = vmatprep.subr.bf16.mxu0 0
    %1248 = vmatpush2.bf16.msra.mxu0 0
    %1249 = vmatprep.subr.bf16.mxu0 0
    %1250 = vmatpush2.bf16.msra.mxu0 0
    %1251 = vmatprep.mubr.bf16.mxu0 0
    %1252 = vmatmul.mubr.bf16.gmra.mxu0 %v1217
    %v1253 = vpop.f32.mrf.mxu0
    %v1254 = vadd.f32 0.0, %v1253
    %v1255 = vpop.f32.mrf.mxu0
    %v1256 = vpop.f32.mrf.mxu0
    %v1257 = vadd.f32 0.0, %v1256
    %v1258 = vpop.f32.mrf.mxu0
    %1259 = vdwg.mxu0
    %v1260 = vpack.c.bf16 %v1194, %v1193
    %s1261 = scalar_lea.vmem %s2, 48
    %v1262 = vld [vmem:[%s1261] sm:$0xf]
    %v1263 = vld [vmem:[%s1261 + $0x4] sm:$0xf]
    %v1264 = vld [vmem:[%s1261 + $0x8] sm:$0xf]
    %v1265 = vld [vmem:[%s1261 + $0xc] sm:$0xf]
    %v1270 = vunpack.c.l.b16 %v1262
    %v1271 = vunpack.c.l.b16 %v1263
    %v1272 = vunpack.c.l.b16 %v1264
    %v1273 = vunpack.c.l.b16 %v1265
    %v1274 = vpack.c.b16 %v1271, %v1270
    %v1275 = vpack.c.b16 %v1273, %v1272
    %v1279 = vsel %vm49, %v1260, 0
    %1281 = vmatprep.subr.bf16.mxu0 0
    %1282 = vmatpush1.bf16.msra.mxu0 0
    %1283 = vmatprep.subr.bf16.mxu0 0
    %1284 = vmatpush1.bf16.msra.mxu0 0
    %1285 = vmatprep.subr.bf16.mxu0 0
    %1286 = vmatpush1.bf16.msra.mxu0 0
    %1287 = vmatprep.subr.bf16.mxu0 0
    %1288 = vmatpush1.bf16.msra.mxu0 0
    %1289 = vmatprep.subr.bf16.mxu0 0
    %1290 = vmatpush1.bf16.msra.mxu0 0
    %1291 = vmatprep.subr.bf16.mxu0 0
    %1292 = vmatpush1.bf16.msra.mxu0 0
    %1293 = vmatprep.subr.bf16.mxu0 0
    %1294 = vmatpush1.bf16.msra.mxu0 %v1275
    %1295 = vmatprep.subr.bf16.mxu0 0
    %1296 = vmatpush1.bf16.msra.mxu0 %v1274
    %1297 = vmatprep.subr.bf16.mxu0 0
    %1298 = vmatpush2.bf16.msra.mxu0 0
    %1299 = vmatprep.subr.bf16.mxu0 0
    %1300 = vmatpush2.bf16.msra.mxu0 0
    %1301 = vmatprep.subr.bf16.mxu0 0
    %1302 = vmatpush2.bf16.msra.mxu0 0
    %1303 = vmatprep.subr.bf16.mxu0 0
    %1304 = vmatpush2.bf16.msra.mxu0 0
    %1305 = vmatprep.subr.bf16.mxu0 0
    %1306 = vmatpush2.bf16.msra.mxu0 0
    %1307 = vmatprep.subr.bf16.mxu0 0
    %1308 = vmatpush2.bf16.msra.mxu0 0
    %1309 = vmatprep.subr.bf16.mxu0 0
    %1310 = vmatpush2.bf16.msra.mxu0 0
    %1311 = vmatprep.subr.bf16.mxu0 0
    %1312 = vmatpush2.bf16.msra.mxu0 0
    %1313 = vmatprep.mubr.bf16.mxu0 0
    %1314 = vmatmul.mubr.bf16.gmra.mxu0 %v1279
    %v1315 = vpop.f32.mrf.mxu0
    %v1316 = vadd.f32 0.0, %v1315
    %v1317 = vpop.f32.mrf.mxu0
    %v1318 = vpop.f32.mrf.mxu0
    %v1319 = vadd.f32 0.0, %v1318
    %v1320 = vpop.f32.mrf.mxu0
    %1321 = vdwg.mxu0
    %v1322 = vlaneseq
    %v1323 = vshrl.u32 %v1322, 7
    %v1324 = vsub.s32 0, %v1323
    %v1325 = vrot.slane %v1196, %v1324
    %v1326 = vadd.f32 %v1254, %v1325
    %v1327 = vadd.f32 %v1257, %v1325
    %v1328 = vlaneseq
    %v1329 = vshrl.u32 %v1328, 7
    %v1330 = vsub.s32 1, %v1329
    %v1331 = vrot.slane %v1196, %v1330
    %1333 = vrot.lane.b32.xlu0 %v1331, 32
    %v1334 = vpop.permute.xlu0 %1333
    %v1336 = vadd.f32 %v1254, %v1334
    %v1337 = vadd.f32 %v1257, %v1334
    %v1338 = vlaneseq
    %v1339 = vshrl.u32 %v1338, 7
    %v1340 = vsub.s32 2, %v1339
    %v1341 = vrot.slane %v1196, %v1340
    %1343 = vrot.lane.b32.xlu0 %v1341, 64
    %v1344 = vpop.permute.xlu0 %1343
    %v1346 = vadd.f32 %v1254, %v1344
    %v1347 = vadd.f32 %v1257, %v1344
    %v1348 = vlaneseq
    %v1349 = vshrl.u32 %v1348, 7
    %v1350 = vsub.s32 3, %v1349
    %v1351 = vrot.slane %v1196, %v1350
    %v1352 = vadd.f32 %v1316, %v1351
    %v1353 = vadd.f32 %v1319, %v1351
    %v1354 = vlaneseq
    %v1355 = vshrl.u32 %v1354, 7
    %v1356 = vsub.s32 4, %v1355
    %v1357 = vrot.slane %v1196, %v1356
    %1359 = vrot.lane.b32.xlu0 %v1357, 32
    %v1360 = vpop.permute.xlu0 %1359
    %v1362 = vadd.f32 %v1316, %v1360
    %v1363 = vadd.f32 %v1319, %v1360
    %v1364 = vlaneseq
    %v1365 = vshrl.u32 %v1364, 7
    %v1366 = vsub.s32 5, %v1365
    %v1367 = vrot.slane %v1196, %v1366
    %1369 = vrot.lane.b32.xlu0 %v1367, 64
    %v1370 = vpop.permute.xlu0 %1369
    %v1372 = vadd.f32 %v1316, %v1370
    %v1373 = vadd.f32 %v1319, %v1370
    %v1374 = vpack.c.bf16 %v1327, %v1326
    %v1375 = vpack.c.bf16 %v1353, %v1352
    %v1376 = vpack.c.bf16 %v1363, %v1362
    %v1377 = vpack.c.bf16 %v1337, %v1336
    %v1378 = vpack.c.bf16 %v1373, %v1372
    %v1379 = vpack.c.bf16 %v1347, %v1346
    %1382 = vrot.lane.b32.xlu0 %v1376, 96
    %v1383 = vpop.permute.xlu0 %1382
    %1384 = vrot.lane.b32.xlu0 %v1377, 96
    %v1385 = vpop.permute.xlu0 %1384
    %v1387 = vsel %vm220, %v1374, 0
    %v1390 = vsel %vm220, %v1375, 0
    %v1393 = vsel %vm220, %v1383, 0
    %v1396 = vsel %vm220, %v1385, 0
    %1398 = vmatprep.subr.bf16.mxu0 0
    %1399 = vmatpush1.bf16.xpose.msra.mxu0 0
    %1400 = vmatprep.subr.bf16.mxu0 0
    %1401 = vmatpush1.bf16.xpose.msra.mxu0 0
    %1402 = vmatprep.subr.bf16.mxu0 0
    %1403 = vmatpush1.bf16.xpose.msra.mxu0 0
    %1404 = vmatprep.subr.bf16.mxu0 0
    %1405 = vmatpush1.bf16.xpose.msra.mxu0 0
    %1406 = vmatprep.subr.bf16.mxu0 0
    %1407 = vmatpush1.bf16.xpose.msra.mxu0 0
    %1408 = vmatprep.subr.bf16.mxu0 0
    %1409 = vmatpush1.bf16.xpose.msra.mxu0 0
    %1410 = vmatprep.subr.bf16.mxu0 0
    %1411 = vmatpush1.bf16.xpose.msra.mxu0 %v1396
    %1412 = vmatprep.subr.bf16.mxu0 0
    %1413 = vmatpush1.bf16.xpose.msra.mxu0 %v1393
    %1414 = vmatprep.subr.bf16.mxu0 0
    %1415 = vmatpush2.bf16.xpose.msra.mxu0 0
    %1416 = vmatprep.subr.bf16.mxu0 0
    %1417 = vmatpush2.bf16.xpose.msra.mxu0 0
    %1418 = vmatprep.subr.bf16.mxu0 0
    %1419 = vmatpush2.bf16.xpose.msra.mxu0 0
    %1420 = vmatprep.subr.bf16.mxu0 0
    %1421 = vmatpush2.bf16.xpose.msra.mxu0 0
    %1422 = vmatprep.subr.bf16.mxu0 0
    %1423 = vmatpush2.bf16.xpose.msra.mxu0 0
    %1424 = vmatprep.subr.bf16.mxu0 0
    %1425 = vmatpush2.bf16.xpose.msra.mxu0 0
    %1426 = vmatprep.subr.bf16.mxu0 0
    %1427 = vmatpush2.bf16.xpose.msra.mxu0 0
    %1428 = vmatprep.subr.bf16.mxu0 0
    %1429 = vmatpush2.bf16.xpose.msra.mxu0 0
    %1430 = vmatprep.mubr.bf16.mxu0 0
    %1431 = vmatmul.mubr.bf16.gmra.mxu0 %v1387
    %v1432 = vpop.f32.mrf.mxu0
    %v1433 = vadd.f32 %v26, %v1432
    %v1434 = vpop.f32.mrf.mxu0
    %v1435 = vpop.f32.mrf.mxu0
    %v1436 = vadd.f32 %v27, %v1435
    %v1437 = vpop.f32.mrf.mxu0
    %1438 = vmatprep.mubr.bf16.mxu0 0
    %1439 = vmatmul.mubr.bf16.gmra.mxu0 %v1390
    %v1440 = vpop.f32.mrf.mxu0
    %v1441 = vadd.f32 %v28, %v1440
    %v1442 = vpop.f32.mrf.mxu0
    %v1443 = vpop.f32.mrf.mxu0
    %v1444 = vadd.f32 %v29, %v1443
    %v1445 = vpop.f32.mrf.mxu0
    %1446 = vdwg.mxu0
    %v1447 = vsel %vm49, %v1433, -inf
    %1448 = vmax.xlane.f32.xlu0 %v1447
    %v1449 = vpop.xlane.xlu0 %1448
    %v1450 = vsel %vm49, %v1436, -inf
    %1451 = vmax.xlane.f32.xlu0 %v1450
    %v1452 = vpop.xlane.xlu0 %1451
    %v1453 = vsel %vm49, %v1441, -inf
    %1454 = vmax.xlane.f32.xlu0 %v1453
    %v1455 = vpop.xlane.xlu0 %1454
    %v1456 = vsel %vm49, %v1444, -inf
    %1457 = vmax.xlane.f32.xlu0 %v1456
    %v1458 = vpop.xlane.xlu0 %1457
    %v1459 = vsub.f32 %v1433, %v1449
    %v1460 = vsub.f32 %v1436, %v1452
    %v1461 = vsub.f32 %v1441, %v1455
    %v1462 = vsub.f32 %v1444, %v1458
    %v1463 = vmul.f32 %v1459, 1.442695
    %v1464 = vpow.pop %v1463
    %v1465 = vmul.f32 %v1460, 1.442695
    %v1466 = vpow.pop %v1465
    %v1467 = vmul.f32 %v1461, 1.442695
    %v1468 = vpow.pop %v1467
    %v1469 = vmul.f32 %v1462, 1.442695
    %v1470 = vpow.pop %v1469
    %v1471 = vsel %vm49, %v1464, 0.0
    %1472 = vadd.xlane.f32.xlu0 %v1471
    %v1473 = vpop.xlane.xlu0 %1472
    %v1474 = vsel %vm49, %v1466, 0.0
    %1475 = vadd.xlane.f32.xlu0 %v1474
    %v1476 = vpop.xlane.xlu0 %1475
    %v1477 = vsel %vm49, %v1468, 0.0
    %1478 = vadd.xlane.f32.xlu0 %v1477
    %v1479 = vpop.xlane.xlu0 %1478
    %v1480 = vsel %vm49, %v1470, 0.0
    %1481 = vadd.xlane.f32.xlu0 %v1480
    %v1482 = vpop.xlane.xlu0 %1481
    %v1483 = vrcp.pop %v1473
    %v1484 = vrcp.pop %v1476
    %v1485 = vrcp.pop %v1479
    %v1486 = vrcp.pop %v1482
    %v1487 = vmul.f32 %v1464, %v1483
    %v1488 = vmul.f32 %v1466, %v1484
    %v1489 = vmul.f32 %v1468, %v1485
    %v1490 = vmul.f32 %v1470, %v1486
    %v1491 = vpack.c.bf16 %v1488, %v1487
    %v1492 = vpack.c.bf16 %v1490, %v1489
    %1495 = vrot.lane.b32.xlu0 %v1378, 64
    %v1496 = vpop.permute.xlu0 %1495
    %1497 = vrot.lane.b32.xlu0 %v1379, 64
    %v1498 = vpop.permute.xlu0 %1497
    %v1502 = vsel %vm49, %v1491, 0
    %v1505 = vsel %vm49, %v1492, 0
    %1507 = vmatprep.subr.bf16.mxu0 0
    %1508 = vmatpush1.bf16.msra.mxu0 0
    %1509 = vmatprep.subr.bf16.mxu0 0
    %1510 = vmatpush1.bf16.msra.mxu0 0
    %1511 = vmatprep.subr.bf16.mxu0 0
    %1512 = vmatpush1.bf16.msra.mxu0 0
    %1513 = vmatprep.subr.bf16.mxu0 0
    %1514 = vmatpush1.bf16.msra.mxu0 0
    %1515 = vmatprep.subr.bf16.mxu0 0
    %1516 = vmatpush1.bf16.msra.mxu0 0
    %1517 = vmatprep.subr.bf16.mxu0 0
    %1518 = vmatpush1.bf16.msra.mxu0 0
    %1519 = vmatprep.subr.bf16.mxu0 0
    %1520 = vmatpush1.bf16.msra.mxu0 %v1498
    %1521 = vmatprep.subr.bf16.mxu0 0
    %1522 = vmatpush1.bf16.msra.mxu0 %v1496
    %1523 = vmatprep.subr.bf16.mxu0 0
    %1524 = vmatpush2.bf16.msra.mxu0 0
    %1525 = vmatprep.subr.bf16.mxu0 0
    %1526 = vmatpush2.bf16.msra.mxu0 0
    %1527 = vmatprep.subr.bf16.mxu0 0
    %1528 = vmatpush2.bf16.msra.mxu0 0
    %1529 = vmatprep.subr.bf16.mxu0 0
    %1530 = vmatpush2.bf16.msra.mxu0 0
    %1531 = vmatprep.subr.bf16.mxu0 0
    %1532 = vmatpush2.bf16.msra.mxu0 0
    %1533 = vmatprep.subr.bf16.mxu0 0
    %1534 = vmatpush2.bf16.msra.mxu0 0
    %1535 = vmatprep.subr.bf16.mxu0 0
    %1536 = vmatpush2.bf16.msra.mxu0 0
    %1537 = vmatprep.subr.bf16.mxu0 0
    %1538 = vmatpush2.bf16.msra.mxu0 0
    %1539 = vmatprep.mubr.bf16.mxu0 0
    %1540 = vmatmul.mubr.bf16.gmra.mxu0 %v1502
    %v1541 = vpop.f32.mrf.mxu0
    %v1542 = vadd.f32 0.0, %v1541
    %v1543 = vpop.f32.mrf.mxu0
    %v1544 = vpop.f32.mrf.mxu0
    %v1545 = vadd.f32 0.0, %v1544
    %v1546 = vpop.f32.mrf.mxu0
    %1547 = vmatprep.mubr.bf16.mxu0 0
    %1548 = vmatmul.mubr.bf16.gmra.mxu0 %v1505
    %v1549 = vpop.f32.mrf.mxu0
    %v1550 = vadd.f32 0.0, %v1549
    %v1551 = vpop.f32.mrf.mxu0
    %v1552 = vpop.f32.mrf.mxu0
    %v1553 = vadd.f32 0.0, %v1552
    %v1554 = vpop.f32.mrf.mxu0
    %1555 = vdwg.mxu0
    %1558 = vrot.lane.b32.xlu0 %v1374, 120
    %v1559 = vpop.permute.xlu0 %1558
    %1560 = vrot.lane.b32.xlu0 %v1375, 120
    %v1561 = vpop.permute.xlu0 %1560
    %1562 = vrot.lane.b32.xlu0 %v1376, 88
    %v1563 = vpop.permute.xlu0 %1562
    %1564 = vrot.lane.b32.xlu0 %v1377, 88
    %v1565 = vpop.permute.xlu0 %1564
    %v1567 = vsel %vm220, %v1559, 0
    %v1570 = vsel %vm220, %v1561, 0
    %v1573 = vsel %vm220, %v1563, 0
    %v1576 = vsel %vm220, %v1565, 0
    %1578 = vmatprep.subr.bf16.mxu0 0
    %1579 = vmatpush1.bf16.xpose.msra.mxu0 0
    %1580 = vmatprep.subr.bf16.mxu0 0
    %1581 = vmatpush1.bf16.xpose.msra.mxu0 0
    %1582 = vmatprep.subr.bf16.mxu0 0
    %1583 = vmatpush1.bf16.xpose.msra.mxu0 0
    %1584 = vmatprep.subr.bf16.mxu0 0
    %1585 = vmatpush1.bf16.xpose.msra.mxu0 0
    %1586 = vmatprep.subr.bf16.mxu0 0
    %1587 = vmatpush1.bf16.xpose.msra.mxu0 0
    %1588 = vmatprep.subr.bf16.mxu0 0
    %1589 = vmatpush1.bf16.xpose.msra.mxu0 0
    %1590 = vmatprep.subr.bf16.mxu0 0
    %1591 = vmatpush1.bf16.xpose.msra.mxu0 %v1576
    %1592 = vmatprep.subr.bf16.mxu0 0
    %1593 = vmatpush1.bf16.xpose.msra.mxu0 %v1573
    %1594 = vmatprep.subr.bf16.mxu0 0
    %1595 = vmatpush2.bf16.xpose.msra.mxu0 0
    %1596 = vmatprep.subr.bf16.mxu0 0
    %1597 = vmatpush2.bf16.xpose.msra.mxu0 0
    %1598 = vmatprep.subr.bf16.mxu0 0
    %1599 = vmatpush2.bf16.xpose.msra.mxu0 0
    %1600 = vmatprep.subr.bf16.mxu0 0
    %1601 = vmatpush2.bf16.xpose.msra.mxu0 0
    %1602 = vmatprep.subr.bf16.mxu0 0
    %1603 = vmatpush2.bf16.xpose.msra.mxu0 0
    %1604 = vmatprep.subr.bf16.mxu0 0
    %1605 = vmatpush2.bf16.xpose.msra.mxu0 0
    %1606 = vmatprep.subr.bf16.mxu0 0
    %1607 = vmatpush2.bf16.xpose.msra.mxu0 0
    %1608 = vmatprep.subr.bf16.mxu0 0
    %1609 = vmatpush2.bf16.xpose.msra.mxu0 0
    %1610 = vmatprep.mubr.bf16.mxu0 0
    %1611 = vmatmul.mubr.bf16.gmra.mxu0 %v1567
    %v1612 = vpop.f32.mrf.mxu0
    %v1613 = vadd.f32 %v26, %v1612
    %v1614 = vpop.f32.mrf.mxu0
    %v1615 = vpop.f32.mrf.mxu0
    %v1616 = vadd.f32 %v27, %v1615
    %v1617 = vpop.f32.mrf.mxu0
    %1618 = vmatprep.mubr.bf16.mxu0 0
    %1619 = vmatmul.mubr.bf16.gmra.mxu0 %v1570
    %v1620 = vpop.f32.mrf.mxu0
    %v1621 = vadd.f32 %v28, %v1620
    %v1622 = vpop.f32.mrf.mxu0
    %v1623 = vpop.f32.mrf.mxu0
    %v1624 = vadd.f32 %v29, %v1623
    %v1625 = vpop.f32.mrf.mxu0
    %1626 = vdwg.mxu0
    %v1627 = vsel %vm49, %v1613, -inf
    %1628 = vmax.xlane.f32.xlu0 %v1627
    %v1629 = vpop.xlane.xlu0 %1628
    %v1630 = vsel %vm49, %v1616, -inf
    %1631 = vmax.xlane.f32.xlu0 %v1630
    %v1632 = vpop.xlane.xlu0 %1631
    %v1633 = vsel %vm49, %v1621, -inf
    %1634 = vmax.xlane.f32.xlu0 %v1633
    %v1635 = vpop.xlane.xlu0 %1634
    %v1636 = vsel %vm49, %v1624, -inf
    %1637 = vmax.xlane.f32.xlu0 %v1636
    %v1638 = vpop.xlane.xlu0 %1637
    %v1639 = vsub.f32 %v1613, %v1629
    %v1640 = vsub.f32 %v1616, %v1632
    %v1641 = vsub.f32 %v1621, %v1635
    %v1642 = vsub.f32 %v1624, %v1638
    %v1643 = vmul.f32 %v1639, 1.442695
    %v1644 = vpow.pop %v1643
    %v1645 = vmul.f32 %v1640, 1.442695
    %v1646 = vpow.pop %v1645
    %v1647 = vmul.f32 %v1641, 1.442695
    %v1648 = vpow.pop %v1647
    %v1649 = vmul.f32 %v1642, 1.442695
    %v1650 = vpow.pop %v1649
    %v1651 = vsel %vm49, %v1644, 0.0
    %1652 = vadd.xlane.f32.xlu0 %v1651
    %v1653 = vpop.xlane.xlu0 %1652
    %v1654 = vsel %vm49, %v1646, 0.0
    %1655 = vadd.xlane.f32.xlu0 %v1654
    %v1656 = vpop.xlane.xlu0 %1655
    %v1657 = vsel %vm49, %v1648, 0.0
    %1658 = vadd.xlane.f32.xlu0 %v1657
    %v1659 = vpop.xlane.xlu0 %1658
    %v1660 = vsel %vm49, %v1650, 0.0
    %1661 = vadd.xlane.f32.xlu0 %v1660
    %v1662 = vpop.xlane.xlu0 %1661
    %v1663 = vrcp.pop %v1653
    %v1664 = vrcp.pop %v1656
    %v1665 = vrcp.pop %v1659
    %v1666 = vrcp.pop %v1662
    %v1667 = vmul.f32 %v1644, %v1663
    %v1668 = vmul.f32 %v1646, %v1664
    %v1669 = vmul.f32 %v1648, %v1665
    %v1670 = vmul.f32 %v1650, %v1666
    %v1671 = vpack.c.bf16 %v1668, %v1667
    %v1672 = vpack.c.bf16 %v1670, %v1669
    %1673 = vrot.lane.b32.xlu0 %v1378, 56
    %v1674 = vpop.permute.xlu0 %1673
    %1675 = vrot.lane.b32.xlu0 %v1379, 56
    %v1676 = vpop.permute.xlu0 %1675
    %v1680 = vsel %vm49, %v1671, 0
    %v1683 = vsel %vm49, %v1672, 0
    %1685 = vmatprep.subr.bf16.mxu0 0
    %1686 = vmatpush1.bf16.msra.mxu0 0
    %1687 = vmatprep.subr.bf16.mxu0 0
    %1688 = vmatpush1.bf16.msra.mxu0 0
    %1689 = vmatprep.subr.bf16.mxu0 0
    %1690 = vmatpush1.bf16.msra.mxu0 0
    %1691 = vmatprep.subr.bf16.mxu0 0
    %1692 = vmatpush1.bf16.msra.mxu0 0
    %1693 = vmatprep.subr.bf16.mxu0 0
    %1694 = vmatpush1.bf16.msra.mxu0 0
    %1695 = vmatprep.subr.bf16.mxu0 0
    %1696 = vmatpush1.bf16.msra.mxu0 0
    %1697 = vmatprep.subr.bf16.mxu0 0
    %1698 = vmatpush1.bf16.msra.mxu0 %v1676
    %1699 = vmatprep.subr.bf16.mxu0 0
    %1700 = vmatpush1.bf16.msra.mxu0 %v1674
    %1701 = vmatprep.subr.bf16.mxu0 0
    %1702 = vmatpush2.bf16.msra.mxu0 0
    %1703 = vmatprep.subr.bf16.mxu0 0
    %1704 = vmatpush2.bf16.msra.mxu0 0
    %1705 = vmatprep.subr.bf16.mxu0 0
    %1706 = vmatpush2.bf16.msra.mxu0 0
    %1707 = vmatprep.subr.bf16.mxu0 0
    %1708 = vmatpush2.bf16.msra.mxu0 0
    %1709 = vmatprep.subr.bf16.mxu0 0
    %1710 = vmatpush2.bf16.msra.mxu0 0
    %1711 = vmatprep.subr.bf16.mxu0 0
    %1712 = vmatpush2.bf16.msra.mxu0 0
    %1713 = vmatprep.subr.bf16.mxu0 0
    %1714 = vmatpush2.bf16.msra.mxu0 0
    %1715 = vmatprep.subr.bf16.mxu0 0
    %1716 = vmatpush2.bf16.msra.mxu0 0
    %1717 = vmatprep.mubr.bf16.mxu0 0
    %1718 = vmatmul.mubr.bf16.gmra.mxu0 %v1680
    %v1719 = vpop.f32.mrf.mxu0
    %v1720 = vadd.f32 0.0, %v1719
    %v1721 = vpop.f32.mrf.mxu0
    %v1722 = vpop.f32.mrf.mxu0
    %v1723 = vadd.f32 0.0, %v1722
    %v1724 = vpop.f32.mrf.mxu0
    %1725 = vmatprep.mubr.bf16.mxu0 0
    %1726 = vmatmul.mubr.bf16.gmra.mxu0 %v1683
    %v1727 = vpop.f32.mrf.mxu0
    %v1728 = vadd.f32 0.0, %v1727
    %v1729 = vpop.f32.mrf.mxu0
    %v1730 = vpop.f32.mrf.mxu0
    %v1731 = vadd.f32 0.0, %v1730
    %v1732 = vpop.f32.mrf.mxu0
    %1733 = vdwg.mxu0
    %1734 = vrot.lane.b32.xlu0 %v1374, 112
    %v1735 = vpop.permute.xlu0 %1734
    %1736 = vrot.lane.b32.xlu0 %v1375, 112
    %v1737 = vpop.permute.xlu0 %1736
    %1738 = vrot.lane.b32.xlu0 %v1376, 80
    %v1739 = vpop.permute.xlu0 %1738
    %1740 = vrot.lane.b32.xlu0 %v1377, 80
    %v1741 = vpop.permute.xlu0 %1740
    %v1743 = vsel %vm220, %v1735, 0
    %v1746 = vsel %vm220, %v1737, 0
    %v1749 = vsel %vm220, %v1739, 0
    %v1752 = vsel %vm220, %v1741, 0
    %1754 = vmatprep.subr.bf16.mxu0 0
    %1755 = vmatpush1.bf16.xpose.msra.mxu0 0
    %1756 = vmatprep.subr.bf16.mxu0 0
    %1757 = vmatpush1.bf16.xpose.msra.mxu0 0
    %1758 = vmatprep.subr.bf16.mxu0 0
    %1759 = vmatpush1.bf16.xpose.msra.mxu0 0
    %1760 = vmatprep.subr.bf16.mxu0 0
    %1761 = vmatpush1.bf16.xpose.msra.mxu0 0
    %1762 = vmatprep.subr.bf16.mxu0 0
    %1763 = vmatpush1.bf16.xpose.msra.mxu0 0
    %1764 = vmatprep.subr.bf16.mxu0 0
    %1765 = vmatpush1.bf16.xpose.msra.mxu0 0
    %1766 = vmatprep.subr.bf16.mxu0 0
    %1767 = vmatpush1.bf16.xpose.msra.mxu0 %v1752
    %1768 = vmatprep.subr.bf16.mxu0 0
    %1769 = vmatpush1.bf16.xpose.msra.mxu0 %v1749
    %1770 = vmatprep.subr.bf16.mxu0 0
    %1771 = vmatpush2.bf16.xpose.msra.mxu0 0
    %1772 = vmatprep.subr.bf16.mxu0 0
    %1773 = vmatpush2.bf16.xpose.msra.mxu0 0
    %1774 = vmatprep.subr.bf16.mxu0 0
    %1775 = vmatpush2.bf16.xpose.msra.mxu0 0
    %1776 = vmatprep.subr.bf16.mxu0 0
    %1777 = vmatpush2.bf16.xpose.msra.mxu0 0
    %1778 = vmatprep.subr.bf16.mxu0 0
    %1779 = vmatpush2.bf16.xpose.msra.mxu0 0
    %1780 = vmatprep.subr.bf16.mxu0 0
    %1781 = vmatpush2.bf16.xpose.msra.mxu0 0
    %1782 = vmatprep.subr.bf16.mxu0 0
    %1783 = vmatpush2.bf16.xpose.msra.mxu0 0
    %1784 = vmatprep.subr.bf16.mxu0 0
    %1785 = vmatpush2.bf16.xpose.msra.mxu0 0
    %1786 = vmatprep.mubr.bf16.mxu0 0
    %1787 = vmatmul.mubr.bf16.gmra.mxu0 %v1743
    %v1788 = vpop.f32.mrf.mxu0
    %v1789 = vadd.f32 %v26, %v1788
    %v1790 = vpop.f32.mrf.mxu0
    %v1791 = vpop.f32.mrf.mxu0
    %v1792 = vadd.f32 %v27, %v1791
    %v1793 = vpop.f32.mrf.mxu0
    %1794 = vmatprep.mubr.bf16.mxu0 0
    %1795 = vmatmul.mubr.bf16.gmra.mxu0 %v1746
    %v1796 = vpop.f32.mrf.mxu0
    %v1797 = vadd.f32 %v28, %v1796
    %v1798 = vpop.f32.mrf.mxu0
    %v1799 = vpop.f32.mrf.mxu0
    %v1800 = vadd.f32 %v29, %v1799
    %v1801 = vpop.f32.mrf.mxu0
    %1802 = vdwg.mxu0
    %v1803 = vsel %vm49, %v1789, -inf
    %1804 = vmax.xlane.f32.xlu0 %v1803
    %v1805 = vpop.xlane.xlu0 %1804
    %v1806 = vsel %vm49, %v1792, -inf
    %1807 = vmax.xlane.f32.xlu0 %v1806
    %v1808 = vpop.xlane.xlu0 %1807
    %v1809 = vsel %vm49, %v1797, -inf
    %1810 = vmax.xlane.f32.xlu0 %v1809
    %v1811 = vpop.xlane.xlu0 %1810
    %v1812 = vsel %vm49, %v1800, -inf
    %1813 = vmax.xlane.f32.xlu0 %v1812
    %v1814 = vpop.xlane.xlu0 %1813
    %v1815 = vsub.f32 %v1789, %v1805
    %v1816 = vsub.f32 %v1792, %v1808
    %v1817 = vsub.f32 %v1797, %v1811
    %v1818 = vsub.f32 %v1800, %v1814
    %v1819 = vmul.f32 %v1815, 1.442695
    %v1820 = vpow.pop %v1819
    %v1821 = vmul.f32 %v1816, 1.442695
    %v1822 = vpow.pop %v1821
    %v1823 = vmul.f32 %v1817, 1.442695
    %v1824 = vpow.pop %v1823
    %v1825 = vmul.f32 %v1818, 1.442695
    %v1826 = vpow.pop %v1825
    %v1827 = vsel %vm49, %v1820, 0.0
    %1828 = vadd.xlane.f32.xlu0 %v1827
    %v1829 = vpop.xlane.xlu0 %1828
    %v1830 = vsel %vm49, %v1822, 0.0
    %1831 = vadd.xlane.f32.xlu0 %v1830
    %v1832 = vpop.xlane.xlu0 %1831
    %v1833 = vsel %vm49, %v1824, 0.0
    %1834 = vadd.xlane.f32.xlu0 %v1833
    %v1835 = vpop.xlane.xlu0 %1834
    %v1836 = vsel %vm49, %v1826, 0.0
    %1837 = vadd.xlane.f32.xlu0 %v1836
    %v1838 = vpop.xlane.xlu0 %1837
    %v1839 = vrcp.pop %v1829
    %v1840 = vrcp.pop %v1832
    %v1841 = vrcp.pop %v1835
    %v1842 = vrcp.pop %v1838
    %v1843 = vmul.f32 %v1820, %v1839
    %v1844 = vmul.f32 %v1822, %v1840
    %v1845 = vmul.f32 %v1824, %v1841
    %v1846 = vmul.f32 %v1826, %v1842
    %v1847 = vpack.c.bf16 %v1844, %v1843
    %v1848 = vpack.c.bf16 %v1846, %v1845
    %1849 = vrot.lane.b32.xlu0 %v1378, 48
    %v1850 = vpop.permute.xlu0 %1849
    %1851 = vrot.lane.b32.xlu0 %v1379, 48
    %v1852 = vpop.permute.xlu0 %1851
    %v1856 = vsel %vm49, %v1847, 0
    %v1859 = vsel %vm49, %v1848, 0
    %1861 = vmatprep.subr.bf16.mxu0 0
    %1862 = vmatpush1.bf16.msra.mxu0 0
    %1863 = vmatprep.subr.bf16.mxu0 0
    %1864 = vmatpush1.bf16.msra.mxu0 0
    %1865 = vmatprep.subr.bf16.mxu0 0
    %1866 = vmatpush1.bf16.msra.mxu0 0
    %1867 = vmatprep.subr.bf16.mxu0 0
    %1868 = vmatpush1.bf16.msra.mxu0 0
    %1869 = vmatprep.subr.bf16.mxu0 0
    %1870 = vmatpush1.bf16.msra.mxu0 0
    %1871 = vmatprep.subr.bf16.mxu0 0
    %1872 = vmatpush1.bf16.msra.mxu0 0
    %1873 = vmatprep.subr.bf16.mxu0 0
    %1874 = vmatpush1.bf16.msra.mxu0 %v1852
    %1875 = vmatprep.subr.bf16.mxu0 0
    %1876 = vmatpush1.bf16.msra.mxu0 %v1850
    %1877 = vmatprep.subr.bf16.mxu0 0
    %1878 = vmatpush2.bf16.msra.mxu0 0
    %1879 = vmatprep.subr.bf16.mxu0 0
    %1880 = vmatpush2.bf16.msra.mxu0 0
    %1881 = vmatprep.subr.bf16.mxu0 0
    %1882 = vmatpush2.bf16.msra.mxu0 0
    %1883 = vmatprep.subr.bf16.mxu0 0
    %1884 = vmatpush2.bf16.msra.mxu0 0
    %1885 = vmatprep.subr.bf16.mxu0 0
    %1886 = vmatpush2.bf16.msra.mxu0 0
    %1887 = vmatprep.subr.bf16.mxu0 0
    %1888 = vmatpush2.bf16.msra.mxu0 0
    %1889 = vmatprep.subr.bf16.mxu0 0
    %1890 = vmatpush2.bf16.msra.mxu0 0
    %1891 = vmatprep.subr.bf16.mxu0 0
    %1892 = vmatpush2.bf16.msra.mxu0 0
    %1893 = vmatprep.mubr.bf16.mxu0 0
    %1894 = vmatmul.mubr.bf16.gmra.mxu0 %v1856
    %v1895 = vpop.f32.mrf.mxu0
    %v1896 = vadd.f32 0.0, %v1895
    %v1897 = vpop.f32.mrf.mxu0
    %v1898 = vpop.f32.mrf.mxu0
    %v1899 = vadd.f32 0.0, %v1898
    %v1900 = vpop.f32.mrf.mxu0
    %1901 = vmatprep.mubr.bf16.mxu0 0
    %1902 = vmatmul.mubr.bf16.gmra.mxu0 %v1859
    %v1903 = vpop.f32.mrf.mxu0
    %v1904 = vadd.f32 0.0, %v1903
    %v1905 = vpop.f32.mrf.mxu0
    %v1906 = vpop.f32.mrf.mxu0
    %v1907 = vadd.f32 0.0, %v1906
    %v1908 = vpop.f32.mrf.mxu0
    %1909 = vdwg.mxu0
    %1910 = vrot.lane.b32.xlu0 %v1374, 104
    %v1911 = vpop.permute.xlu0 %1910
    %1912 = vrot.lane.b32.xlu0 %v1375, 104
    %v1913 = vpop.permute.xlu0 %1912
    %1914 = vrot.lane.b32.xlu0 %v1376, 72
    %v1915 = vpop.permute.xlu0 %1914
    %1916 = vrot.lane.b32.xlu0 %v1377, 72
    %v1917 = vpop.permute.xlu0 %1916
    %v1919 = vsel %vm220, %v1911, 0
    %v1922 = vsel %vm220, %v1913, 0
    %v1925 = vsel %vm220, %v1915, 0
    %v1928 = vsel %vm220, %v1917, 0
    %1930 = vmatprep.subr.bf16.mxu0 0
    %1931 = vmatpush1.bf16.xpose.msra.mxu0 0
    %1932 = vmatprep.subr.bf16.mxu0 0
    %1933 = vmatpush1.bf16.xpose.msra.mxu0 0
    %1934 = vmatprep.subr.bf16.mxu0 0
    %1935 = vmatpush1.bf16.xpose.msra.mxu0 0
    %1936 = vmatprep.subr.bf16.mxu0 0
    %1937 = vmatpush1.bf16.xpose.msra.mxu0 0
    %1938 = vmatprep.subr.bf16.mxu0 0
    %1939 = vmatpush1.bf16.xpose.msra.mxu0 0
    %1940 = vmatprep.subr.bf16.mxu0 0
    %1941 = vmatpush1.bf16.xpose.msra.mxu0 0
    %1942 = vmatprep.subr.bf16.mxu0 0
    %1943 = vmatpush1.bf16.xpose.msra.mxu0 %v1928
    %1944 = vmatprep.subr.bf16.mxu0 0
    %1945 = vmatpush1.bf16.xpose.msra.mxu0 %v1925
    %1946 = vmatprep.subr.bf16.mxu0 0
    %1947 = vmatpush2.bf16.xpose.msra.mxu0 0
    %1948 = vmatprep.subr.bf16.mxu0 0
    %1949 = vmatpush2.bf16.xpose.msra.mxu0 0
    %1950 = vmatprep.subr.bf16.mxu0 0
    %1951 = vmatpush2.bf16.xpose.msra.mxu0 0
    %1952 = vmatprep.subr.bf16.mxu0 0
    %1953 = vmatpush2.bf16.xpose.msra.mxu0 0
    %1954 = vmatprep.subr.bf16.mxu0 0
    %1955 = vmatpush2.bf16.xpose.msra.mxu0 0
    %1956 = vmatprep.subr.bf16.mxu0 0
    %1957 = vmatpush2.bf16.xpose.msra.mxu0 0
    %1958 = vmatprep.subr.bf16.mxu0 0
    %1959 = vmatpush2.bf16.xpose.msra.mxu0 0
    %1960 = vmatprep.subr.bf16.mxu0 0
    %1961 = vmatpush2.bf16.xpose.msra.mxu0 0
    %1962 = vmatprep.mubr.bf16.mxu0 0
    %1963 = vmatmul.mubr.bf16.gmra.mxu0 %v1919
    %v1964 = vpop.f32.mrf.mxu0
    %v1965 = vadd.f32 %v26, %v1964
    %v1966 = vpop.f32.mrf.mxu0
    %v1967 = vpop.f32.mrf.mxu0
    %v1968 = vadd.f32 %v27, %v1967
    %v1969 = vpop.f32.mrf.mxu0
    %1970 = vmatprep.mubr.bf16.mxu0 0
    %1971 = vmatmul.mubr.bf16.gmra.mxu0 %v1922
    %v1972 = vpop.f32.mrf.mxu0
    %v1973 = vadd.f32 %v28, %v1972
    %v1974 = vpop.f32.mrf.mxu0
    %v1975 = vpop.f32.mrf.mxu0
    %v1976 = vadd.f32 %v29, %v1975
    %v1977 = vpop.f32.mrf.mxu0
    %1978 = vdwg.mxu0
    %v1979 = vsel %vm49, %v1965, -inf
    %1980 = vmax.xlane.f32.xlu0 %v1979
    %v1981 = vpop.xlane.xlu0 %1980
    %v1982 = vsel %vm49, %v1968, -inf
    %1983 = vmax.xlane.f32.xlu0 %v1982
    %v1984 = vpop.xlane.xlu0 %1983
    %v1985 = vsel %vm49, %v1973, -inf
    %1986 = vmax.xlane.f32.xlu0 %v1985
    %v1987 = vpop.xlane.xlu0 %1986
    %v1988 = vsel %vm49, %v1976, -inf
    %1989 = vmax.xlane.f32.xlu0 %v1988
    %v1990 = vpop.xlane.xlu0 %1989
    %v1991 = vsub.f32 %v1965, %v1981
    %v1992 = vsub.f32 %v1968, %v1984
    %v1993 = vsub.f32 %v1973, %v1987
    %v1994 = vsub.f32 %v1976, %v1990
    %v1995 = vmul.f32 %v1991, 1.442695
    %v1996 = vpow.pop %v1995
    %v1997 = vmul.f32 %v1992, 1.442695
    %v1998 = vpow.pop %v1997
    %v1999 = vmul.f32 %v1993, 1.442695
    %v2000 = vpow.pop %v1999
    %v2001 = vmul.f32 %v1994, 1.442695
    %v2002 = vpow.pop %v2001
    %v2003 = vsel %vm49, %v1996, 0.0
    %2004 = vadd.xlane.f32.xlu0 %v2003
    %v2005 = vpop.xlane.xlu0 %2004
    %v2006 = vsel %vm49, %v1998, 0.0
    %2007 = vadd.xlane.f32.xlu0 %v2006
    %v2008 = vpop.xlane.xlu0 %2007
    %v2009 = vsel %vm49, %v2000, 0.0
    %2010 = vadd.xlane.f32.xlu0 %v2009
    %v2011 = vpop.xlane.xlu0 %2010
    %v2012 = vsel %vm49, %v2002, 0.0
    %2013 = vadd.xlane.f32.xlu0 %v2012
    %v2014 = vpop.xlane.xlu0 %2013
    %v2015 = vrcp.pop %v2005
    %v2016 = vrcp.pop %v2008
    %v2017 = vrcp.pop %v2011
    %v2018 = vrcp.pop %v2014
    %v2019 = vmul.f32 %v1996, %v2015
    %v2020 = vmul.f32 %v1998, %v2016
    %v2021 = vmul.f32 %v2000, %v2017
    %v2022 = vmul.f32 %v2002, %v2018
    %v2023 = vpack.c.bf16 %v2020, %v2019
    %v2024 = vpack.c.bf16 %v2022, %v2021
    %2025 = vrot.lane.b32.xlu0 %v1378, 40
    %v2026 = vpop.permute.xlu0 %2025
    %2027 = vrot.lane.b32.xlu0 %v1379, 40
    %v2028 = vpop.permute.xlu0 %2027
    %v2032 = vsel %vm49, %v2023, 0
    %v2035 = vsel %vm49, %v2024, 0
    %2037 = vmatprep.subr.bf16.mxu0 0
    %2038 = vmatpush1.bf16.msra.mxu0 0
    %2039 = vmatprep.subr.bf16.mxu0 0
    %2040 = vmatpush1.bf16.msra.mxu0 0
    %2041 = vmatprep.subr.bf16.mxu0 0
    %2042 = vmatpush1.bf16.msra.mxu0 0
    %2043 = vmatprep.subr.bf16.mxu0 0
    %2044 = vmatpush1.bf16.msra.mxu0 0
    %2045 = vmatprep.subr.bf16.mxu0 0
    %2046 = vmatpush1.bf16.msra.mxu0 0
    %2047 = vmatprep.subr.bf16.mxu0 0
    %2048 = vmatpush1.bf16.msra.mxu0 0
    %2049 = vmatprep.subr.bf16.mxu0 0
    %2050 = vmatpush1.bf16.msra.mxu0 %v2028
    %2051 = vmatprep.subr.bf16.mxu0 0
    %2052 = vmatpush1.bf16.msra.mxu0 %v2026
    %2053 = vmatprep.subr.bf16.mxu0 0
    %2054 = vmatpush2.bf16.msra.mxu0 0
    %2055 = vmatprep.subr.bf16.mxu0 0
    %2056 = vmatpush2.bf16.msra.mxu0 0
    %2057 = vmatprep.subr.bf16.mxu0 0
    %2058 = vmatpush2.bf16.msra.mxu0 0
    %2059 = vmatprep.subr.bf16.mxu0 0
    %2060 = vmatpush2.bf16.msra.mxu0 0
    %2061 = vmatprep.subr.bf16.mxu0 0
    %2062 = vmatpush2.bf16.msra.mxu0 0
    %2063 = vmatprep.subr.bf16.mxu0 0
    %2064 = vmatpush2.bf16.msra.mxu0 0
    %2065 = vmatprep.subr.bf16.mxu0 0
    %2066 = vmatpush2.bf16.msra.mxu0 0
    %2067 = vmatprep.subr.bf16.mxu0 0
    %2068 = vmatpush2.bf16.msra.mxu0 0
    %2069 = vmatprep.mubr.bf16.mxu0 0
    %2070 = vmatmul.mubr.bf16.gmra.mxu0 %v2032
    %v2071 = vpop.f32.mrf.mxu0
    %v2072 = vadd.f32 0.0, %v2071
    %v2073 = vpop.f32.mrf.mxu0
    %v2074 = vpop.f32.mrf.mxu0
    %v2075 = vadd.f32 0.0, %v2074
    %v2076 = vpop.f32.mrf.mxu0
    %2077 = vmatprep.mubr.bf16.mxu0 0
    %2078 = vmatmul.mubr.bf16.gmra.mxu0 %v2035
    %v2079 = vpop.f32.mrf.mxu0
    %v2080 = vadd.f32 0.0, %v2079
    %v2081 = vpop.f32.mrf.mxu0
    %v2082 = vpop.f32.mrf.mxu0
    %v2083 = vadd.f32 0.0, %v2082
    %v2084 = vpop.f32.mrf.mxu0
    %2085 = vdwg.mxu0
    %2090 = vrot.lane.b32.xlu0 %v1720, 8
    %v2091 = vpop.permute.xlu0 %2090
    %2092 = vrot.lane.b32.xlu0 %v1723, 8
    %v2093 = vpop.permute.xlu0 %2092
    %2094 = vrot.lane.b32.xlu0 %v1728, 8
    %v2095 = vpop.permute.xlu0 %2094
    %2096 = vrot.lane.b32.xlu0 %v1731, 8
    %v2097 = vpop.permute.xlu0 %2096
    %2106 = vrot.lane.b32.xlu0 %v1896, 16
    %v2107 = vpop.permute.xlu0 %2106
    %2108 = vrot.lane.b32.xlu0 %v1899, 16
    %v2109 = vpop.permute.xlu0 %2108
    %2110 = vrot.lane.b32.xlu0 %v1904, 16
    %v2111 = vpop.permute.xlu0 %2110
    %2112 = vrot.lane.b32.xlu0 %v1907, 16
    %v2113 = vpop.permute.xlu0 %2112
    %2122 = vrot.lane.b32.xlu0 %v2072, 24
    %v2123 = vpop.permute.xlu0 %2122
    %2124 = vrot.lane.b32.xlu0 %v2075, 24
    %v2125 = vpop.permute.xlu0 %2124
    %2126 = vrot.lane.b32.xlu0 %v2080, 24
    %v2127 = vpop.permute.xlu0 %2126
    %2128 = vrot.lane.b32.xlu0 %v2083, 24
    %v2129 = vpop.permute.xlu0 %2128
    %v2134 = vsel %vm220, %v1542, %v2091
    %v2135 = vsel %vm220, %v1545, %v2093
    %v2136 = vsel %vm220, %v1550, %v2095
    %v2137 = vsel %vm220, %v1553, %v2097
    %v2138 = vsel %vm973, %v2134, %v2107
    %v2139 = vsel %vm973, %v2135, %v2109
    %v2140 = vsel %vm973, %v2136, %v2111
    %v2141 = vsel %vm973, %v2137, %v2113
    %v2142 = vsel %vm978, %v2138, %v2123
    %v2143 = vsel %vm978, %v2139, %v2125
    %v2144 = vsel %vm978, %v2140, %v2127
    %v2145 = vsel %vm978, %v2141, %v2129
    %v2146 = vpack.c.bf16 %v2143, %v2142
    %s2147 = scalar_lea.vmem %s3, 32
    %v2148 = vld [vmem:[%s2147] sm:$0xf]
    %v2149 = vld [vmem:[%s2147 + $0x4] sm:$0xf]
    %v2150 = vld [vmem:[%s2147 + $0x8] sm:$0xf]
    %v2151 = vld [vmem:[%s2147 + $0xc] sm:$0xf]
    %v2152 = vlaneseq
    %v2153 = vshrl.u32 %v2152, 7
    %v2154 = vsub.s32 6, %v2153
    %v2155 = vrot.slane %v1196, %v2154
    %v2160 = vunpack.c.l.b16 %v2148
    %v2161 = vunpack.c.l.b16 %v2149
    %v2162 = vunpack.c.l.b16 %v2150
    %v2163 = vunpack.c.l.b16 %v2151
    %v2164 = vpack.c.b16 %v2161, %v2160
    %v2165 = vpack.c.b16 %v2163, %v2162
    %v2169 = vsel %vm49, %v2146, 0
    %2171 = vmatprep.subr.bf16.mxu0 0
    %2172 = vmatpush1.bf16.msra.mxu0 0
    %2173 = vmatprep.subr.bf16.mxu0 0
    %2174 = vmatpush1.bf16.msra.mxu0 0
    %2175 = vmatprep.subr.bf16.mxu0 0
    %2176 = vmatpush1.bf16.msra.mxu0 0
    %2177 = vmatprep.subr.bf16.mxu0 0
    %2178 = vmatpush1.bf16.msra.mxu0 0
    %2179 = vmatprep.subr.bf16.mxu0 0
    %2180 = vmatpush1.bf16.msra.mxu0 0
    %2181 = vmatprep.subr.bf16.mxu0 0
    %2182 = vmatpush1.bf16.msra.mxu0 0
    %2183 = vmatprep.subr.bf16.mxu0 0
    %2184 = vmatpush1.bf16.msra.mxu0 %v2165
    %2185 = vmatprep.subr.bf16.mxu0 0
    %2186 = vmatpush1.bf16.msra.mxu0 %v2164
    %2187 = vmatprep.subr.bf16.mxu0 0
    %2188 = vmatpush2.bf16.msra.mxu0 0
    %2189 = vmatprep.subr.bf16.mxu0 0
    %2190 = vmatpush2.bf16.msra.mxu0 0
    %2191 = vmatprep.subr.bf16.mxu0 0
    %2192 = vmatpush2.bf16.msra.mxu0 0
    %2193 = vmatprep.subr.bf16.mxu0 0
    %2194 = vmatpush2.bf16.msra.mxu0 0
    %2195 = vmatprep.subr.bf16.mxu0 0
    %2196 = vmatpush2.bf16.msra.mxu0 0
    %2197 = vmatprep.subr.bf16.mxu0 0
    %2198 = vmatpush2.bf16.msra.mxu0 0
    %2199 = vmatprep.subr.bf16.mxu0 0
    %2200 = vmatpush2.bf16.msra.mxu0 0
    %2201 = vmatprep.subr.bf16.mxu0 0
    %2202 = vmatpush2.bf16.msra.mxu0 0
    %2203 = vmatprep.mubr.bf16.mxu0 0
    %2204 = vmatmul.mubr.bf16.gmra.mxu0 %v2169
    %v2205 = vpop.f32.mrf.mxu0
    %v2206 = vadd.f32 %v2155, %v2205
    %v2207 = vpop.f32.mrf.mxu0
    %v2208 = vpop.f32.mrf.mxu0
    %v2209 = vadd.f32 %v2155, %v2208
    %v2210 = vpop.f32.mrf.mxu0
    %2211 = vdwg.mxu0
    %v2212 = vpack.c.bf16 %v2145, %v2144
    %s2213 = scalar_lea.vmem %s3, 48
    %v2214 = vld [vmem:[%s2213] sm:$0xf]
    %v2215 = vld [vmem:[%s2213 + $0x4] sm:$0xf]
    %v2216 = vld [vmem:[%s2213 + $0x8] sm:$0xf]
    %v2217 = vld [vmem:[%s2213 + $0xc] sm:$0xf]
    %v2218 = vlaneseq
    %v2219 = vshrl.u32 %v2218, 7
    %v2220 = vsub.s32 7, %v2219
    %v2221 = vrot.slane %v1196, %v2220
    %v2226 = vunpack.c.l.b16 %v2214
    %v2227 = vunpack.c.l.b16 %v2215
    %v2228 = vunpack.c.l.b16 %v2216
    %v2229 = vunpack.c.l.b16 %v2217
    %v2230 = vpack.c.b16 %v2227, %v2226
    %v2231 = vpack.c.b16 %v2229, %v2228
    %v2235 = vsel %vm49, %v2212, 0
    %2237 = vmatprep.subr.bf16.mxu0 0
    %2238 = vmatpush1.bf16.msra.mxu0 0
    %2239 = vmatprep.subr.bf16.mxu0 0
    %2240 = vmatpush1.bf16.msra.mxu0 0
    %2241 = vmatprep.subr.bf16.mxu0 0
    %2242 = vmatpush1.bf16.msra.mxu0 0
    %2243 = vmatprep.subr.bf16.mxu0 0
    %2244 = vmatpush1.bf16.msra.mxu0 0
    %2245 = vmatprep.subr.bf16.mxu0 0
    %2246 = vmatpush1.bf16.msra.mxu0 0
    %2247 = vmatprep.subr.bf16.mxu0 0
    %2248 = vmatpush1.bf16.msra.mxu0 0
    %2249 = vmatprep.subr.bf16.mxu0 0
    %2250 = vmatpush1.bf16.msra.mxu0 %v2231
    %2251 = vmatprep.subr.bf16.mxu0 0
    %2252 = vmatpush1.bf16.msra.mxu0 %v2230
    %2253 = vmatprep.subr.bf16.mxu0 0
    %2254 = vmatpush2.bf16.msra.mxu0 0
    %2255 = vmatprep.subr.bf16.mxu0 0
    %2256 = vmatpush2.bf16.msra.mxu0 0
    %2257 = vmatprep.subr.bf16.mxu0 0
    %2258 = vmatpush2.bf16.msra.mxu0 0
    %2259 = vmatprep.subr.bf16.mxu0 0
    %2260 = vmatpush2.bf16.msra.mxu0 0
    %2261 = vmatprep.subr.bf16.mxu0 0
    %2262 = vmatpush2.bf16.msra.mxu0 0
    %2263 = vmatprep.subr.bf16.mxu0 0
    %2264 = vmatpush2.bf16.msra.mxu0 0
    %2265 = vmatprep.subr.bf16.mxu0 0
    %2266 = vmatpush2.bf16.msra.mxu0 0
    %2267 = vmatprep.subr.bf16.mxu0 0
    %2268 = vmatpush2.bf16.msra.mxu0 0
    %2269 = vmatprep.mubr.bf16.mxu0 0
    %2270 = vmatmul.mubr.bf16.gmra.mxu0 %v2235
    %v2271 = vpop.f32.mrf.mxu0
    %v2272 = vadd.f32 %v2221, %v2271
    %v2273 = vpop.f32.mrf.mxu0
    %v2274 = vpop.f32.mrf.mxu0
    %v2275 = vadd.f32 %v2221, %v2274
    %v2276 = vpop.f32.mrf.mxu0
    %2277 = vdwg.mxu0
    %v2278 = vsel %vm49, %v2272, 0.0
    %2279 = vadd.xlane.f32.xlu0 %v2278
    %v2280 = vpop.xlane.xlu0 %2279
    %v2281 = vsel %vm49, %v2275, 0.0
    %2282 = vadd.xlane.f32.xlu0 %v2281
    %v2283 = vpop.xlane.xlu0 %2282
    %v2284 = vmul.f32 %v2280, %v1120
    %v2285 = vmul.f32 %v2283, %v1120
    %v2286 = vsub.f32 %v2272, %v2284
    %v2287 = vsub.f32 %v2275, %v2285
    %v2288 = vmul.f32 %v2286, %v2286
    %v2289 = vmul.f32 %v2287, %v2287
    %v2290 = vsel %vm49, %v2288, 0.0
    %2291 = vadd.xlane.f32.xlu0 %v2290
    %v2292 = vpop.xlane.xlu0 %2291
    %v2293 = vsel %vm49, %v2289, 0.0
    %2294 = vadd.xlane.f32.xlu0 %v2293
    %v2295 = vpop.xlane.xlu0 %2294
    %v2296 = vmul.f32 %v2292, %v1120
    %v2297 = vmul.f32 %v2295, %v1120
    %v2298 = vadd.f32 %v2296, 1e-05
    %v2299 = vadd.f32 %v2297, 1e-05
    %v2300 = vrsqrt.pop %v2298
    %v2301 = vrsqrt.pop %v2299
    %v2302 = vmul.f32 %v2286, %v2300
    %v2303 = vmul.f32 %v2287, %v2301
    %v2304 = vlaneseq
    %v2305 = vshrl.u32 %v2304, 7
    %v2306 = vsub.s32 0, %v2305
    %v2307 = vrot.slane %v1197, %v2306
    %v2308 = vmul.f32 %v2302, %v2307
    %v2309 = vmul.f32 %v2303, %v2307
    %v2310 = vlaneseq
    %v2311 = vshrl.u32 %v2310, 7
    %v2312 = vsub.s32 1, %v2311
    %v2313 = vrot.slane %v1197, %v2312
    %v2314 = vadd.f32 %v2308, %v2313
    %v2315 = vadd.f32 %v2309, %v2313
    %v2316 = vadd.f32 %v1153, %v2314
    %v2317 = vadd.f32 %v1154, %v2315
    %v2318 = vsel %vm49, %v2206, 0.0
    %2319 = vadd.xlane.f32.xlu0 %v2318
    %v2320 = vpop.xlane.xlu0 %2319
    %v2321 = vsel %vm49, %v2209, 0.0
    %2322 = vadd.xlane.f32.xlu0 %v2321
    %v2323 = vpop.xlane.xlu0 %2322
    %v2324 = vmul.f32 %v2320, %v1120
    %v2325 = vmul.f32 %v2323, %v1120
    %v2326 = vsub.f32 %v2206, %v2324
    %v2327 = vsub.f32 %v2209, %v2325
    %v2328 = vmul.f32 %v2326, %v2326
    %v2329 = vmul.f32 %v2327, %v2327
    %v2330 = vsel %vm49, %v2328, 0.0
    %2331 = vadd.xlane.f32.xlu0 %v2330
    %v2332 = vpop.xlane.xlu0 %2331
    %v2333 = vsel %vm49, %v2329, 0.0
    %2334 = vadd.xlane.f32.xlu0 %v2333
    %v2335 = vpop.xlane.xlu0 %2334
    %v2336 = vmul.f32 %v2332, %v1120
    %v2337 = vmul.f32 %v2335, %v1120
    %v2338 = vadd.f32 %v2336, 1e-05
    %v2339 = vadd.f32 %v2337, 1e-05
    %v2340 = vrsqrt.pop %v2338
    %v2341 = vrsqrt.pop %v2339
    %v2342 = vmul.f32 %v2326, %v2340
    %v2343 = vmul.f32 %v2327, %v2341
    %v2344 = vlaneseq
    %v2345 = vshrl.u32 %v2344, 7
    %v2346 = vsub.s32 2, %v2345
    %v2347 = vrot.slane %v1197, %v2346
    %v2348 = vmul.f32 %v2342, %v2347
    %v2349 = vmul.f32 %v2343, %v2347
    %v2350 = vlaneseq
    %v2351 = vshrl.u32 %v2350, 7
    %v2352 = vsub.s32 3, %v2351
    %v2353 = vrot.slane %v1197, %v2352
    %v2354 = vadd.f32 %v2348, %v2353
    %v2355 = vadd.f32 %v2349, %v2353
    %v2356 = vadd.f32 %v1193, %v2354
    %v2357 = vadd.f32 %v1194, %v2355
    %v2358 = vadd.f32 %v2316, %v2356
    %v2359 = vadd.f32 %v2317, %v2357
    %v2360 = vmul.f32 %v2358, 0.5
    %v2361 = vmul.f32 %v2359, 0.5
    %2362 = vst.msk [vmem:[#allocation2] sm:$0xff] %vm49, %v2360
    %2363 = vst.msk [vmem:[#allocation2 + $0x8] sm:$0xff] %vm49, %v2361
    // Predicated region
    $region22: #{bidirectional_cross_attention.1} parent=1 // pred_check
      _
    $region23: #{bidirectional_cross_attention.1} parent=1 // pred_check_branch
      %2365 = sbr.rel (0) target = $region25
    $region24: #{bidirectional_cross_attention.1} parent=1 // pred_region
      %s2367 = ssub.s32 256, 256
      %2368 = vsyncadd [#allocation3], %s2367
      %s2369 = sshll.u32 [#allocation2], 4
      %s2370 = int_to_ptr.vmem [resolvable:$true] %s2369
      %2375 = dma.vmem_to_hbm [thread:$0]  %s2370, 256, %s5, [#allocation3], 128, 128, 8
    $region25: #{bidirectional_cross_attention.1} parent=1 // pred_fallthru
      _
    // Predicated region
    $region26: #{bidirectional_cross_attention.1} parent=1 // pred_check
      _
    $region27: #{bidirectional_cross_attention.1} parent=1 // pred_check_branch
      %2377 = sbr.rel (0) target = $region29
    $region28: #{bidirectional_cross_attention.1} parent=1 // pred_region
      %2378 = dma.done [#allocation3], 256
    $region29: #{bidirectional_cross_attention.1} parent=1 // pred_fallthru
      _
    %2379 = vsyncpa [#allocation3], 1

</llo_original>
